<compile_context>
chip_gen: v7x
topology: tpu7x:2x2x1
jax: 0.10.0
libtpu: 0.0.40
codegen_flags: <defaults>
</compile_context>

<pallas_src>
import math
from functools import partial

import jax
import jax.numpy as jnp
from jax import lax
from jax.experimental import pallas as pl
from jax.experimental.pallas import tpu as pltpu

D_MODEL = 32
NHEAD = 4
HEAD_DIM = D_MODEL // NHEAD
LN_EPS = 1e-5


def _self_attn_kernel(xqk_ref, xv_ref, w_ref, vec_ref, out_ref, *,
                      n_heads, head_dim, nb, compute_dtype):
    """One block of NB batch elements: per-batch QKV projection -> multi-head
    softmax attention -> out projection -> residual add -> LayerNorm.
    All refs live in VMEM."""
    E = n_heads * head_dim

    w = w_ref[...]                                # (E, 4E): [wq_t*scale | wk_t | wv_t | wo_t]
    wq_t = w[:, 0 * E:1 * E]
    wk_t = w[:, 1 * E:2 * E]
    wv_t = w[:, 2 * E:3 * E]
    wo_t = w[:, 3 * E:4 * E]

    vec = vec_ref[...]                            # (8, E) f32 packed vectors
    bq, bk, bv, bo = vec[0:1, :], vec[1:2, :], vec[2:3, :], vec[3:4, :]
    gamma, beta = vec[4:5, :], vec[5:6, :]

    for b in range(nb):                           # static unroll over batch elems in block
        xqk = xqk_ref[b]                          # (L, E) f32: tgt + query_pos
        xv = xv_ref[b]                            # (L, E) f32: tgt (values + residual)
        xqk_c = xqk.astype(compute_dtype)
        xv_c = xv.astype(compute_dtype)

        # Projections (MXU, narrow inputs / f32 accumulation).
        # Wq / bq already carry the 1/sqrt(head_dim) attention scale.
        q = jnp.dot(xqk_c, wq_t, preferred_element_type=jnp.float32) + bq   # (L, E)
        k = jnp.dot(xqk_c, wk_t, preferred_element_type=jnp.float32) + bk   # (L, E)
        v = jnp.dot(xv_c, wv_t, preferred_element_type=jnp.float32) + bv    # (L, E)

        proj = None                               # (L, E) out-projection accumulator
        for h in range(n_heads):                  # static unroll; no XLU transpose/concat
            lo = h * head_dim
            hi = lo + head_dim
            qh = q[:, lo:hi].astype(compute_dtype)
            kh = k[:, lo:hi].astype(compute_dtype)
            vh = v[:, lo:hi].astype(compute_dtype)
            # q @ k^T via dot_general contracting the last dims (no transpose op).
            s = lax.dot_general(qh, kh, (((1,), (1,)), ((), ())),
                                preferred_element_type=jnp.float32)          # (L, L) f32
            s = s - jnp.max(s, axis=-1, keepdims=True)
            p = jnp.exp(s)
            p = p * pl.reciprocal(jnp.sum(p, axis=-1, keepdims=True), approx=True)
            oh = jnp.dot(p.astype(compute_dtype), vh,
                         preferred_element_type=jnp.float32)                 # (L, hd)
            # Fold this head straight into the output projection.
            term = jnp.dot(oh.astype(compute_dtype), wo_t[lo:hi, :],
                           preferred_element_type=jnp.float32)               # (L, E)
            proj = term if proj is None else proj + term
        proj = proj + bo

        x = xv + proj                             # residual (dropout p=0 -> identity), f32
        mean = jnp.mean(x, axis=-1, keepdims=True)
        cx = x - mean
        var = jnp.mean(cx * cx, axis=-1, keepdims=True)
        out_ref[b] = (cx * lax.rsqrt(var + LN_EPS)) * gamma + beta


def self_attention_layer(tgt, params, query_pos=None, *,
                         compute_dtype=jnp.bfloat16):
    """Pallas equivalent of SelfAttentionLayer.forward (forward_post path).

    tgt:       (L, N, E) float32  (sequence-first, like nn.MultiheadAttention)
    query_pos: optional (L, N, E) positional embedding.
    compute_dtype: dtype of the MXU operands (bf16 by default; f32 exact).
    """
    L, N, E = tgt.shape
    assert E == D_MODEL

    qk = tgt if query_pos is None else tgt + query_pos
    # Batch-major: (L, N, E) -> (N, L, E).  One cheap XLA transpose; attention
    # then stays strictly within a batch element (no cross-batch mask at all).
    qk_b = jnp.transpose(qk, (1, 0, 2))
    tgt_b = jnp.transpose(tgt, (1, 0, 2))

    # Fold the attention scale into Wq / bq; cast MXU weights to compute_dtype.
    scale = 1.0 / math.sqrt(HEAD_DIM)
    w = params["w_packed"]                         # (E, 4E) f32, torch-equivalent
    w_kernel = jnp.concatenate([w[:, :E] * scale, w[:, E:]],
                               axis=1).astype(compute_dtype)
    vec = params["vec_packed"]                     # (8, E) f32
    vec_kernel = jnp.concatenate([vec[0:1] * scale, vec[1:]], axis=0)

    # Batches per grid step: as many as a conservative (double-buffered) VMEM
    # budget allows, capped at 8 to bound the static unroll, and dividing N.
    per_batch_bytes = 2 * 3 * L * E * 4            # dbl-buffered qk + tgt + out, f32
    budget = 8 * 1024 * 1024
    nb_cap = int(max(1, min(N, 8, budget // per_batch_bytes)))
    NB = max(d for d in range(1, nb_cap + 1) if N % d == 0)
    n_blocks = N // NB

    batch_block = pl.BlockSpec((NB, L, E), lambda i: (i, 0, 0))
    w_spec = pl.BlockSpec((E, 4 * E), lambda i: (0, 0))
    vec_spec = pl.BlockSpec((8, E), lambda i: (0, 0))

    grid_spec = pltpu.PrefetchScalarGridSpec(
        num_scalar_prefetch=0,
        grid=(n_blocks,),
        in_specs=[
            batch_block,   # tgt + query_pos (queries and keys)
            batch_block,   # tgt (values AND residual)
            w_spec,        # packed weights (E, 4E), lane-dense
            vec_spec,      # packed bias / LN vectors (8, E)
        ],
        out_specs=batch_block,
    )

    # Explicit VMEM budget (default scoped limit differs per chip generation)
    # and a cost estimate so XLA can overlap surrounding ops with this call.
    w_bytes = E * 4 * E * jnp.dtype(compute_dtype).itemsize + 8 * E * 4
    vmem_limit = int(min(96 * 1024 * 1024,
                         max(4 * 1024 * 1024,
                             4 * (NB * per_batch_bytes + w_bytes))))
    cost = pl.CostEstimate(
        flops=int(N * (8 * L * E * E + 4 * L * L * E)),
        transcendentals=int(N * NHEAD * L * L),
        bytes_accessed=int(3 * N * L * E * 4 + w_bytes),
    )

    out_b = pl.pallas_call(
        partial(_self_attn_kernel, n_heads=NHEAD, head_dim=HEAD_DIM, nb=NB,
                compute_dtype=compute_dtype),
        out_shape=jax.ShapeDtypeStruct((N, L, E), jnp.float32),
        grid_spec=grid_spec,
        compiler_params=pltpu.CompilerParams(
            dimension_semantics=("parallel",),
            vmem_limit_bytes=vmem_limit),
        cost_estimate=cost,
    )(qk_b, tgt_b, w_kernel, vec_kernel)

    return jnp.transpose(out_b, (1, 0, 2))         # back to (L, N, E)


def _reference(tgt, params, query_pos=None):
    """Pure-JAX f32 reference mirroring torch semantics, for correctness check."""
    L, N, E = tgt.shape
    W = params["w_packed"]
    wq_t, wk_t, wv_t, wo_t = (W[:, 0:E], W[:, E:2 * E],
                              W[:, 2 * E:3 * E], W[:, 3 * E:4 * E])
    V = params["vec_packed"]
    bq, bk, bv, bo, gamma, beta = V[0], V[1], V[2], V[3], V[4], V[5]

    qk = tgt if query_pos is None else tgt + query_pos
    qb = jnp.transpose(qk, (1, 0, 2))        # (N, L, E)
    vb = jnp.transpose(tgt, (1, 0, 2))       # (N, L, E)

    q = qb @ wq_t + bq
    k = qb @ wk_t + bk
    v = vb @ wv_t + bv
    qh = q.reshape(N, L, NHEAD, HEAD_DIM).transpose(0, 2, 1, 3)
    kh = k.reshape(N, L, NHEAD, HEAD_DIM).transpose(0, 2, 1, 3)
    vh = v.reshape(N, L, NHEAD, HEAD_DIM).transpose(0, 2, 1, 3)
    s = jnp.einsum("nhqd,nhkd->nhqk", qh, kh) / math.sqrt(HEAD_DIM)
    p = jax.nn.softmax(s, axis=-1)
    o = jnp.einsum("nhqk,nhkd->nhqd", p, vh)
    o = o.transpose(0, 2, 1, 3).reshape(N, L, E)
    proj = o @ wo_t + bo

    x = vb + proj
    mean = jnp.mean(x, axis=-1, keepdims=True)
    var = jnp.mean((x - mean) ** 2, axis=-1, keepdims=True)
    y = (x - mean) / jnp.sqrt(var + LN_EPS)
    y = y * gamma + beta
    return jnp.transpose(y, (1, 0, 2))       # back to (L, N, E)


def _xavier_uniform(key, shape):
    fan_out, fan_in = shape
    bound = math.sqrt(6.0 / (fan_in + fan_out))
    return jax.random.uniform(key, shape, jnp.float32, -bound, bound)


def make_params(key):
    keys = jax.random.split(key, 8)
    E = D_MODEL
    # torch: in_proj_weight (3E, E) xavier, split into q/k/v; out_proj xavier.
    in_proj = _xavier_uniform(keys[0], (3 * E, E))
    wq, wk, wv = in_proj[:E], in_proj[E:2 * E], in_proj[2 * E:]
    wo = _xavier_uniform(keys[1], (E, E))
    # x @ W^T convention -> store transposed, packed along lanes: (E, 4E) = (32, 128)
    w_packed = jnp.concatenate([wq.T, wk.T, wv.T, wo.T], axis=1)
    # Biases / LN affine (small non-zero values so every term is exercised;
    # torch init would be zeros/ones).
    bq = 0.01 * jax.random.normal(keys[2], (E,), jnp.float32)
    bk = 0.01 * jax.random.normal(keys[3], (E,), jnp.float32)
    bv = 0.01 * jax.random.normal(keys[4], (E,), jnp.float32)
    bo = 0.01 * jax.random.normal(keys[5], (E,), jnp.float32)
    gamma = 1.0 + 0.01 * jax.random.normal(keys[6], (E,), jnp.float32)
    beta = 0.01 * jax.random.normal(keys[7], (E,), jnp.float32)
    zeros = jnp.zeros((E,), jnp.float32)
    vec_packed = jnp.stack([bq, bk, bv, bo, gamma, beta, zeros, zeros])  # (8, E)
    return {"w_packed": w_packed, "vec_packed": vec_packed}


if __name__ == "__main__":
    key = jax.random.PRNGKey(0)
    k_param, k_tgt, k_qp = jax.random.split(key, 3)

    N = 2          # batch
    L = 8          # number of queries (sequence length)
    E = D_MODEL    # 32, nhead = 4

    params = make_params(k_param)
    tgt = jax.random.normal(k_tgt, (L, N, E), jnp.float32)
    query_pos = jax.random.normal(k_qp, (L, N, E), jnp.float32)

    # Exact path (f32 MXU operands): validates structure / semantics tightly.
    out_f32 = self_attention_layer(tgt, params, query_pos=query_pos,
                                   compute_dtype=jnp.float32)
    out_f32 = jax.block_until_ready(out_f32)

    # Production path (bf16 MXU operands, f32 softmax/LayerNorm).
    out_bf16 = self_attention_layer(tgt, params, query_pos=query_pos)
    out_bf16 = jax.block_until_ready(out_bf16)

    ref = _reference(tgt, params, query_pos=query_pos)
    assert out_f32.shape == (L, N, E)
    assert out_bf16.shape == (L, N, E)
    # f32 path tolerance is dominated by the approximate EUP reciprocal in the
    # softmax denominator; bf16 path additionally carries matmul rounding.
    assert jnp.allclose(out_f32, ref, atol=2e-3, rtol=2e-3), "f32 mismatch vs reference"
    assert jnp.allclose(out_bf16, ref, atol=1e-1, rtol=1e-1), "bf16 mismatch vs reference"

    print("KERNEL_OK")
</pallas_src>

<mosaic_0001>
module attributes {stable_mosaic.version = 11 : i64} {
  func.func @_self_attn_kernel(%arg0: i32, %arg1: memref<2x8x32xf32, #tpu.memory_space<vmem>>, %arg2: memref<2x8x32xf32, #tpu.memory_space<vmem>>, %arg3: memref<32x128xf32, #tpu.memory_space<vmem>>, %arg4: memref<8x32xf32, #tpu.memory_space<vmem>>, %arg5: memref<2x8x32xf32, #tpu.memory_space<vmem>>) attributes {dimension_semantics = [#tpu.dimension_semantics<parallel>], iteration_bounds = array<i64: 1>, scalar_prefetch = 0 : i64, scratch_operands = 0 : i64, tpu.core_type = #tpu.core_type<tc>, window_params = [{transform_indices = @transform_0, window_bounds = array<i64: 2, 8, 32>}, {transform_indices = @transform_1, window_bounds = array<i64: 2, 8, 32>}, {pipeline_mode = #tpu.pipeline_mode<synchronous>, transform_indices = @transform_2, window_bounds = array<i64: 32, 128>}, {pipeline_mode = #tpu.pipeline_mode<synchronous>, transform_indices = @transform_3, window_bounds = array<i64: 8, 32>}, {transform_indices = @transform_4, window_bounds = array<i64: 2, 8, 32>}]} {
    %c0 = arith.constant 0 : index
    %c0_0 = arith.constant 0 : index
    %0 = vector.load %arg3[%c0, %c0_0] : memref<32x128xf32, #tpu.memory_space<vmem>>, vector<32x128xf32>
    %1 = vector.extract_strided_slice %0 {offsets = [0, 0], sizes = [32, 32], strides = [1, 1]} : vector<32x128xf32> to vector<32x32xf32>
    %2 = vector.extract_strided_slice %0 {offsets = [0, 32], sizes = [32, 32], strides = [1, 1]} : vector<32x128xf32> to vector<32x32xf32>
    %3 = vector.extract_strided_slice %0 {offsets = [0, 64], sizes = [32, 32], strides = [1, 1]} : vector<32x128xf32> to vector<32x32xf32>
    %4 = vector.extract_strided_slice %0 {offsets = [0, 96], sizes = [32, 32], strides = [1, 1]} : vector<32x128xf32> to vector<32x32xf32>
    %c0_1 = arith.constant 0 : index
    %c0_2 = arith.constant 0 : index
    %5 = vector.load %arg4[%c0_1, %c0_2] : memref<8x32xf32, #tpu.memory_space<vmem>>, vector<8x32xf32>
    %6 = vector.extract_strided_slice %5 {offsets = [0, 0], sizes = [1, 32], strides = [1, 1]} : vector<8x32xf32> to vector<1x32xf32>
    %7 = vector.extract_strided_slice %5 {offsets = [1, 0], sizes = [1, 32], strides = [1, 1]} : vector<8x32xf32> to vector<1x32xf32>
    %8 = vector.extract_strided_slice %5 {offsets = [2, 0], sizes = [1, 32], strides = [1, 1]} : vector<8x32xf32> to vector<1x32xf32>
    %9 = vector.extract_strided_slice %5 {offsets = [3, 0], sizes = [1, 32], strides = [1, 1]} : vector<8x32xf32> to vector<1x32xf32>
    %10 = vector.extract_strided_slice %5 {offsets = [4, 0], sizes = [1, 32], strides = [1, 1]} : vector<8x32xf32> to vector<1x32xf32>
    %11 = vector.extract_strided_slice %5 {offsets = [5, 0], sizes = [1, 32], strides = [1, 1]} : vector<8x32xf32> to vector<1x32xf32>
    %c0_3 = arith.constant 0 : index
    %c0_4 = arith.constant 0 : index
    %c0_5 = arith.constant 0 : index
    %12 = vector.load %arg1[%c0_3, %c0_4, %c0_5] : memref<2x8x32xf32, #tpu.memory_space<vmem>>, vector<1x8x32xf32>
    %13 = vector.shape_cast %12 : vector<1x8x32xf32> to vector<8x32xf32>
    %c0_6 = arith.constant 0 : index
    %c0_7 = arith.constant 0 : index
    %c0_8 = arith.constant 0 : index
    %14 = vector.load %arg2[%c0_6, %c0_7, %c0_8] : memref<2x8x32xf32, #tpu.memory_space<vmem>>, vector<1x8x32xf32>
    %15 = vector.shape_cast %14 : vector<1x8x32xf32> to vector<8x32xf32>
    %cst = arith.constant dense<0.000000e+00> : vector<8x32xf32>
    %16 = tpu.matmul %13, %1, %cst {dimension_numbers = #tpu.dot_dimension_numbers<[1], [0], [0], [1], [0, 0, 1, 1], [], []>} : vector<8x32xf32>, vector<32x32xf32>, vector<8x32xf32> -> vector<8x32xf32>
    %17 = vector.broadcast %6 : vector<1x32xf32> to vector<8x32xf32>
    %18 = arith.addf %16, %17 : vector<8x32xf32>
    %cst_9 = arith.constant dense<0.000000e+00> : vector<8x32xf32>
    %19 = tpu.matmul %13, %2, %cst_9 {dimension_numbers = #tpu.dot_dimension_numbers<[1], [0], [0], [1], [0, 0, 1, 1], [], []>} : vector<8x32xf32>, vector<32x32xf32>, vector<8x32xf32> -> vector<8x32xf32>
    %20 = vector.broadcast %7 : vector<1x32xf32> to vector<8x32xf32>
    %21 = arith.addf %19, %20 : vector<8x32xf32>
    %cst_10 = arith.constant dense<0.000000e+00> : vector<8x32xf32>
    %22 = tpu.matmul %15, %3, %cst_10 {dimension_numbers = #tpu.dot_dimension_numbers<[1], [0], [0], [1], [0, 0, 1, 1], [], []>} : vector<8x32xf32>, vector<32x32xf32>, vector<8x32xf32> -> vector<8x32xf32>
    %23 = vector.broadcast %8 : vector<1x32xf32> to vector<8x32xf32>
    %24 = arith.addf %22, %23 : vector<8x32xf32>
    %25 = vector.extract_strided_slice %18 {offsets = [0, 0], sizes = [8, 8], strides = [1, 1]} : vector<8x32xf32> to vector<8x8xf32>
    %26 = vector.extract_strided_slice %21 {offsets = [0, 0], sizes = [8, 8], strides = [1, 1]} : vector<8x32xf32> to vector<8x8xf32>
    %27 = vector.extract_strided_slice %24 {offsets = [0, 0], sizes = [8, 8], strides = [1, 1]} : vector<8x32xf32> to vector<8x8xf32>
    %cst_11 = arith.constant dense<0.000000e+00> : vector<8x8xf32>
    %28 = tpu.matmul %25, %26, %cst_11 {dimension_numbers = #tpu.dot_dimension_numbers<[1], [1], [0], [0], [0, 0, 1, 0], [], []>} : vector<8x8xf32>, vector<8x8xf32>, vector<8x8xf32> -> vector<8x8xf32>
    %cst_12 = arith.constant dense<0xFF800000> : vector<8xf32>
    %29 = vector.multi_reduction <maximumf>, %28, %cst_12 [1] : vector<8x8xf32> to vector<8xf32>
    %30 = vector.shape_cast %29 : vector<8xf32> to vector<8x1xf32>
    %31 = vector.broadcast %30 : vector<8x1xf32> to vector<8x8xf32>
    %32 = arith.subf %28, %31 : vector<8x8xf32>
    %33 = math.exp %32 : vector<8x8xf32>
    %cst_13 = arith.constant dense<0.000000e+00> : vector<8xf32>
    %34 = vector.multi_reduction <add>, %33, %cst_13 [1] : vector<8x8xf32> to vector<8xf32>
    %35 = vector.shape_cast %34 : vector<8xf32> to vector<8x1xf32>
    %36 = tpu.reciprocal %35 {approx = true} : vector<8x1xf32> -> vector<8x1xf32>
    %37 = vector.broadcast %36 : vector<8x1xf32> to vector<8x8xf32>
    %38 = arith.mulf %33, %37 : vector<8x8xf32>
    %cst_14 = arith.constant dense<0.000000e+00> : vector<8x8xf32>
    %39 = tpu.matmul %38, %27, %cst_14 {dimension_numbers = #tpu.dot_dimension_numbers<[1], [0], [0], [1], [0, 0, 1, 1], [], []>} : vector<8x8xf32>, vector<8x8xf32>, vector<8x8xf32> -> vector<8x8xf32>
    %40 = vector.extract_strided_slice %4 {offsets = [0, 0], sizes = [8, 32], strides = [1, 1]} : vector<32x32xf32> to vector<8x32xf32>
    %cst_15 = arith.constant dense<0.000000e+00> : vector<8x32xf32>
    %41 = tpu.matmul %39, %40, %cst_15 {dimension_numbers = #tpu.dot_dimension_numbers<[1], [0], [0], [1], [0, 0, 1, 1], [], []>} : vector<8x8xf32>, vector<8x32xf32>, vector<8x32xf32> -> vector<8x32xf32>
    %42 = vector.extract_strided_slice %18 {offsets = [0, 8], sizes = [8, 8], strides = [1, 1]} : vector<8x32xf32> to vector<8x8xf32>
    %43 = vector.extract_strided_slice %21 {offsets = [0, 8], sizes = [8, 8], strides = [1, 1]} : vector<8x32xf32> to vector<8x8xf32>
    %44 = vector.extract_strided_slice %24 {offsets = [0, 8], sizes = [8, 8], strides = [1, 1]} : vector<8x32xf32> to vector<8x8xf32>
    %cst_16 = arith.constant dense<0.000000e+00> : vector<8x8xf32>
    %45 = tpu.matmul %42, %43, %cst_16 {dimension_numbers = #tpu.dot_dimension_numbers<[1], [1], [0], [0], [0, 0, 1, 0], [], []>} : vector<8x8xf32>, vector<8x8xf32>, vector<8x8xf32> -> vector<8x8xf32>
    %cst_17 = arith.constant dense<0xFF800000> : vector<8xf32>
    %46 = vector.multi_reduction <maximumf>, %45, %cst_17 [1] : vector<8x8xf32> to vector<8xf32>
    %47 = vector.shape_cast %46 : vector<8xf32> to vector<8x1xf32>
    %48 = vector.broadcast %47 : vector<8x1xf32> to vector<8x8xf32>
    %49 = arith.subf %45, %48 : vector<8x8xf32>
    %50 = math.exp %49 : vector<8x8xf32>
    %cst_18 = arith.constant dense<0.000000e+00> : vector<8xf32>
    %51 = vector.multi_reduction <add>, %50, %cst_18 [1] : vector<8x8xf32> to vector<8xf32>
    %52 = vector.shape_cast %51 : vector<8xf32> to vector<8x1xf32>
    %53 = tpu.reciprocal %52 {approx = true} : vector<8x1xf32> -> vector<8x1xf32>
    %54 = vector.broadcast %53 : vector<8x1xf32> to vector<8x8xf32>
    %55 = arith.mulf %50, %54 : vector<8x8xf32>
    %cst_19 = arith.constant dense<0.000000e+00> : vector<8x8xf32>
    %56 = tpu.matmul %55, %44, %cst_19 {dimension_numbers = #tpu.dot_dimension_numbers<[1], [0], [0], [1], [0, 0, 1, 1], [], []>} : vector<8x8xf32>, vector<8x8xf32>, vector<8x8xf32> -> vector<8x8xf32>
    %57 = vector.extract_strided_slice %4 {offsets = [8, 0], sizes = [8, 32], strides = [1, 1]} : vector<32x32xf32> to vector<8x32xf32>
    %cst_20 = arith.constant dense<0.000000e+00> : vector<8x32xf32>
    %58 = tpu.matmul %56, %57, %cst_20 {dimension_numbers = #tpu.dot_dimension_numbers<[1], [0], [0], [1], [0, 0, 1, 1], [], []>} : vector<8x8xf32>, vector<8x32xf32>, vector<8x32xf32> -> vector<8x32xf32>
    %59 = arith.addf %41, %58 : vector<8x32xf32>
    %60 = vector.extract_strided_slice %18 {offsets = [0, 16], sizes = [8, 8], strides = [1, 1]} : vector<8x32xf32> to vector<8x8xf32>
    %61 = vector.extract_strided_slice %21 {offsets = [0, 16], sizes = [8, 8], strides = [1, 1]} : vector<8x32xf32> to vector<8x8xf32>
    %62 = vector.extract_strided_slice %24 {offsets = [0, 16], sizes = [8, 8], strides = [1, 1]} : vector<8x32xf32> to vector<8x8xf32>
    %cst_21 = arith.constant dense<0.000000e+00> : vector<8x8xf32>
    %63 = tpu.matmul %60, %61, %cst_21 {dimension_numbers = #tpu.dot_dimension_numbers<[1], [1], [0], [0], [0, 0, 1, 0], [], []>} : vector<8x8xf32>, vector<8x8xf32>, vector<8x8xf32> -> vector<8x8xf32>
    %cst_22 = arith.constant dense<0xFF800000> : vector<8xf32>
    %64 = vector.multi_reduction <maximumf>, %63, %cst_22 [1] : vector<8x8xf32> to vector<8xf32>
    %65 = vector.shape_cast %64 : vector<8xf32> to vector<8x1xf32>
    %66 = vector.broadcast %65 : vector<8x1xf32> to vector<8x8xf32>
    %67 = arith.subf %63, %66 : vector<8x8xf32>
    %68 = math.exp %67 : vector<8x8xf32>
    %cst_23 = arith.constant dense<0.000000e+00> : vector<8xf32>
    %69 = vector.multi_reduction <add>, %68, %cst_23 [1] : vector<8x8xf32> to vector<8xf32>
    %70 = vector.shape_cast %69 : vector<8xf32> to vector<8x1xf32>
    %71 = tpu.reciprocal %70 {approx = true} : vector<8x1xf32> -> vector<8x1xf32>
    %72 = vector.broadcast %71 : vector<8x1xf32> to vector<8x8xf32>
    %73 = arith.mulf %68, %72 : vector<8x8xf32>
    %cst_24 = arith.constant dense<0.000000e+00> : vector<8x8xf32>
    %74 = tpu.matmul %73, %62, %cst_24 {dimension_numbers = #tpu.dot_dimension_numbers<[1], [0], [0], [1], [0, 0, 1, 1], [], []>} : vector<8x8xf32>, vector<8x8xf32>, vector<8x8xf32> -> vector<8x8xf32>
    %75 = vector.extract_strided_slice %4 {offsets = [16, 0], sizes = [8, 32], strides = [1, 1]} : vector<32x32xf32> to vector<8x32xf32>
    %cst_25 = arith.constant dense<0.000000e+00> : vector<8x32xf32>
    %76 = tpu.matmul %74, %75, %cst_25 {dimension_numbers = #tpu.dot_dimension_numbers<[1], [0], [0], [1], [0, 0, 1, 1], [], []>} : vector<8x8xf32>, vector<8x32xf32>, vector<8x32xf32> -> vector<8x32xf32>
    %77 = arith.addf %59, %76 : vector<8x32xf32>
    %78 = vector.extract_strided_slice %18 {offsets = [0, 24], sizes = [8, 8], strides = [1, 1]} : vector<8x32xf32> to vector<8x8xf32>
    %79 = vector.extract_strided_slice %21 {offsets = [0, 24], sizes = [8, 8], strides = [1, 1]} : vector<8x32xf32> to vector<8x8xf32>
    %80 = vector.extract_strided_slice %24 {offsets = [0, 24], sizes = [8, 8], strides = [1, 1]} : vector<8x32xf32> to vector<8x8xf32>
    %cst_26 = arith.constant dense<0.000000e+00> : vector<8x8xf32>
    %81 = tpu.matmul %78, %79, %cst_26 {dimension_numbers = #tpu.dot_dimension_numbers<[1], [1], [0], [0], [0, 0, 1, 0], [], []>} : vector<8x8xf32>, vector<8x8xf32>, vector<8x8xf32> -> vector<8x8xf32>
    %cst_27 = arith.constant dense<0xFF800000> : vector<8xf32>
    %82 = vector.multi_reduction <maximumf>, %81, %cst_27 [1] : vector<8x8xf32> to vector<8xf32>
    %83 = vector.shape_cast %82 : vector<8xf32> to vector<8x1xf32>
    %84 = vector.broadcast %83 : vector<8x1xf32> to vector<8x8xf32>
    %85 = arith.subf %81, %84 : vector<8x8xf32>
    %86 = math.exp %85 : vector<8x8xf32>
    %cst_28 = arith.constant dense<0.000000e+00> : vector<8xf32>
    %87 = vector.multi_reduction <add>, %86, %cst_28 [1] : vector<8x8xf32> to vector<8xf32>
    %88 = vector.shape_cast %87 : vector<8xf32> to vector<8x1xf32>
    %89 = tpu.reciprocal %88 {approx = true} : vector<8x1xf32> -> vector<8x1xf32>
    %90 = vector.broadcast %89 : vector<8x1xf32> to vector<8x8xf32>
    %91 = arith.mulf %86, %90 : vector<8x8xf32>
    %cst_29 = arith.constant dense<0.000000e+00> : vector<8x8xf32>
    %92 = tpu.matmul %91, %80, %cst_29 {dimension_numbers = #tpu.dot_dimension_numbers<[1], [0], [0], [1], [0, 0, 1, 1], [], []>} : vector<8x8xf32>, vector<8x8xf32>, vector<8x8xf32> -> vector<8x8xf32>
    %93 = vector.extract_strided_slice %4 {offsets = [24, 0], sizes = [8, 32], strides = [1, 1]} : vector<32x32xf32> to vector<8x32xf32>
    %cst_30 = arith.constant dense<0.000000e+00> : vector<8x32xf32>
    %94 = tpu.matmul %92, %93, %cst_30 {dimension_numbers = #tpu.dot_dimension_numbers<[1], [0], [0], [1], [0, 0, 1, 1], [], []>} : vector<8x8xf32>, vector<8x32xf32>, vector<8x32xf32> -> vector<8x32xf32>
    %95 = arith.addf %77, %94 : vector<8x32xf32>
    %96 = vector.broadcast %9 : vector<1x32xf32> to vector<8x32xf32>
    %97 = arith.addf %95, %96 : vector<8x32xf32>
    %98 = arith.addf %15, %97 : vector<8x32xf32>
    %cst_31 = arith.constant dense<0.000000e+00> : vector<8xf32>
    %99 = vector.multi_reduction <add>, %98, %cst_31 [1] : vector<8x32xf32> to vector<8xf32>
    %100 = vector.shape_cast %99 : vector<8xf32> to vector<8x1xf32>
    %cst_32 = arith.constant 3.200000e+01 : f32
    %101 = vector.broadcast %cst_32 : f32 to vector<8x1xf32>
    %102 = arith.divf %100, %101 : vector<8x1xf32>
    %103 = vector.broadcast %102 : vector<8x1xf32> to vector<8x32xf32>
    %104 = arith.subf %98, %103 : vector<8x32xf32>
    %105 = arith.mulf %104, %104 : vector<8x32xf32>
    %cst_33 = arith.constant dense<0.000000e+00> : vector<8xf32>
    %106 = vector.multi_reduction <add>, %105, %cst_33 [1] : vector<8x32xf32> to vector<8xf32>
    %107 = vector.shape_cast %106 : vector<8xf32> to vector<8x1xf32>
    %cst_34 = arith.constant 3.200000e+01 : f32
    %108 = vector.broadcast %cst_34 : f32 to vector<8x1xf32>
    %109 = arith.divf %107, %108 : vector<8x1xf32>
    %cst_35 = arith.constant 9.99999974E-6 : f32
    %110 = vector.broadcast %cst_35 : f32 to vector<8x1xf32>
    %111 = arith.addf %109, %110 : vector<8x1xf32>
    %112 = math.rsqrt %111 : vector<8x1xf32>
    %113 = vector.broadcast %112 : vector<8x1xf32> to vector<8x32xf32>
    %114 = arith.mulf %104, %113 : vector<8x32xf32>
    %115 = vector.broadcast %10 : vector<1x32xf32> to vector<8x32xf32>
    %116 = arith.mulf %114, %115 : vector<8x32xf32>
    %117 = vector.broadcast %11 : vector<1x32xf32> to vector<8x32xf32>
    %118 = arith.addf %116, %117 : vector<8x32xf32>
    %c0_36 = arith.constant 0 : index
    %c0_37 = arith.constant 0 : index
    %c0_38 = arith.constant 0 : index
    %119 = vector.load %arg5[%c0_36, %c0_37, %c0_38] : memref<2x8x32xf32, #tpu.memory_space<vmem>>, vector<1x8x32xf32>
    %120 = vector.shape_cast %119 : vector<1x8x32xf32> to vector<8x32xf32>
    %121 = vector.shape_cast %118 : vector<8x32xf32> to vector<1x8x32xf32>
    tpu.vector_store %arg5[%c0_36, %c0_37, %c0_38], %121 {strides = array<i32>} : memref<2x8x32xf32, #tpu.memory_space<vmem>>, vector<1x8x32xf32>,
    %c1 = arith.constant 1 : index
    %c0_39 = arith.constant 0 : index
    %c0_40 = arith.constant 0 : index
    %122 = vector.load %arg1[%c1, %c0_39, %c0_40] : memref<2x8x32xf32, #tpu.memory_space<vmem>>, vector<1x8x32xf32>
    %123 = vector.shape_cast %122 : vector<1x8x32xf32> to vector<8x32xf32>
    %c1_41 = arith.constant 1 : index
    %c0_42 = arith.constant 0 : index
    %c0_43 = arith.constant 0 : index
    %124 = vector.load %arg2[%c1_41, %c0_42, %c0_43] : memref<2x8x32xf32, #tpu.memory_space<vmem>>, vector<1x8x32xf32>
    %125 = vector.shape_cast %124 : vector<1x8x32xf32> to vector<8x32xf32>
    %cst_44 = arith.constant dense<0.000000e+00> : vector<8x32xf32>
    %126 = tpu.matmul %123, %1, %cst_44 {dimension_numbers = #tpu.dot_dimension_numbers<[1], [0], [0], [1], [0, 0, 1, 1], [], []>} : vector<8x32xf32>, vector<32x32xf32>, vector<8x32xf32> -> vector<8x32xf32>
    %127 = vector.broadcast %6 : vector<1x32xf32> to vector<8x32xf32>
    %128 = arith.addf %126, %127 : vector<8x32xf32>
    %cst_45 = arith.constant dense<0.000000e+00> : vector<8x32xf32>
    %129 = tpu.matmul %123, %2, %cst_45 {dimension_numbers = #tpu.dot_dimension_numbers<[1], [0], [0], [1], [0, 0, 1, 1], [], []>} : vector<8x32xf32>, vector<32x32xf32>, vector<8x32xf32> -> vector<8x32xf32>
    %130 = vector.broadcast %7 : vector<1x32xf32> to vector<8x32xf32>
    %131 = arith.addf %129, %130 : vector<8x32xf32>
    %cst_46 = arith.constant dense<0.000000e+00> : vector<8x32xf32>
    %132 = tpu.matmul %125, %3, %cst_46 {dimension_numbers = #tpu.dot_dimension_numbers<[1], [0], [0], [1], [0, 0, 1, 1], [], []>} : vector<8x32xf32>, vector<32x32xf32>, vector<8x32xf32> -> vector<8x32xf32>
    %133 = vector.broadcast %8 : vector<1x32xf32> to vector<8x32xf32>
    %134 = arith.addf %132, %133 : vector<8x32xf32>
    %135 = vector.extract_strided_slice %128 {offsets = [0, 0], sizes = [8, 8], strides = [1, 1]} : vector<8x32xf32> to vector<8x8xf32>
    %136 = vector.extract_strided_slice %131 {offsets = [0, 0], sizes = [8, 8], strides = [1, 1]} : vector<8x32xf32> to vector<8x8xf32>
    %137 = vector.extract_strided_slice %134 {offsets = [0, 0], sizes = [8, 8], strides = [1, 1]} : vector<8x32xf32> to vector<8x8xf32>
    %cst_47 = arith.constant dense<0.000000e+00> : vector<8x8xf32>
    %138 = tpu.matmul %135, %136, %cst_47 {dimension_numbers = #tpu.dot_dimension_numbers<[1], [1], [0], [0], [0, 0, 1, 0], [], []>} : vector<8x8xf32>, vector<8x8xf32>, vector<8x8xf32> -> vector<8x8xf32>
    %cst_48 = arith.constant dense<0xFF800000> : vector<8xf32>
    %139 = vector.multi_reduction <maximumf>, %138, %cst_48 [1] : vector<8x8xf32> to vector<8xf32>
    %140 = vector.shape_cast %139 : vector<8xf32> to vector<8x1xf32>
    %141 = vector.broadcast %140 : vector<8x1xf32> to vector<8x8xf32>
    %142 = arith.subf %138, %141 : vector<8x8xf32>
    %143 = math.exp %142 : vector<8x8xf32>
    %cst_49 = arith.constant dense<0.000000e+00> : vector<8xf32>
    %144 = vector.multi_reduction <add>, %143, %cst_49 [1] : vector<8x8xf32> to vector<8xf32>
    %145 = vector.shape_cast %144 : vector<8xf32> to vector<8x1xf32>
    %146 = tpu.reciprocal %145 {approx = true} : vector<8x1xf32> -> vector<8x1xf32>
    %147 = vector.broadcast %146 : vector<8x1xf32> to vector<8x8xf32>
    %148 = arith.mulf %143, %147 : vector<8x8xf32>
    %cst_50 = arith.constant dense<0.000000e+00> : vector<8x8xf32>
    %149 = tpu.matmul %148, %137, %cst_50 {dimension_numbers = #tpu.dot_dimension_numbers<[1], [0], [0], [1], [0, 0, 1, 1], [], []>} : vector<8x8xf32>, vector<8x8xf32>, vector<8x8xf32> -> vector<8x8xf32>
    %150 = vector.extract_strided_slice %4 {offsets = [0, 0], sizes = [8, 32], strides = [1, 1]} : vector<32x32xf32> to vector<8x32xf32>
    %cst_51 = arith.constant dense<0.000000e+00> : vector<8x32xf32>
    %151 = tpu.matmul %149, %150, %cst_51 {dimension_numbers = #tpu.dot_dimension_numbers<[1], [0], [0], [1], [0, 0, 1, 1], [], []>} : vector<8x8xf32>, vector<8x32xf32>, vector<8x32xf32> -> vector<8x32xf32>
    %152 = vector.extract_strided_slice %128 {offsets = [0, 8], sizes = [8, 8], strides = [1, 1]} : vector<8x32xf32> to vector<8x8xf32>
    %153 = vector.extract_strided_slice %131 {offsets = [0, 8], sizes = [8, 8], strides = [1, 1]} : vector<8x32xf32> to vector<8x8xf32>
    %154 = vector.extract_strided_slice %134 {offsets = [0, 8], sizes = [8, 8], strides = [1, 1]} : vector<8x32xf32> to vector<8x8xf32>
    %cst_52 = arith.constant dense<0.000000e+00> : vector<8x8xf32>
    %155 = tpu.matmul %152, %153, %cst_52 {dimension_numbers = #tpu.dot_dimension_numbers<[1], [1], [0], [0], [0, 0, 1, 0], [], []>} : vector<8x8xf32>, vector<8x8xf32>, vector<8x8xf32> -> vector<8x8xf32>
    %cst_53 = arith.constant dense<0xFF800000> : vector<8xf32>
    %156 = vector.multi_reduction <maximumf>, %155, %cst_53 [1] : vector<8x8xf32> to vector<8xf32>
    %157 = vector.shape_cast %156 : vector<8xf32> to vector<8x1xf32>
    %158 = vector.broadcast %157 : vector<8x1xf32> to vector<8x8xf32>
    %159 = arith.subf %155, %158 : vector<8x8xf32>
    %160 = math.exp %159 : vector<8x8xf32>
    %cst_54 = arith.constant dense<0.000000e+00> : vector<8xf32>
    %161 = vector.multi_reduction <add>, %160, %cst_54 [1] : vector<8x8xf32> to vector<8xf32>
    %162 = vector.shape_cast %161 : vector<8xf32> to vector<8x1xf32>
    %163 = tpu.reciprocal %162 {approx = true} : vector<8x1xf32> -> vector<8x1xf32>
    %164 = vector.broadcast %163 : vector<8x1xf32> to vector<8x8xf32>
    %165 = arith.mulf %160, %164 : vector<8x8xf32>
    %cst_55 = arith.constant dense<0.000000e+00> : vector<8x8xf32>
    %166 = tpu.matmul %165, %154, %cst_55 {dimension_numbers = #tpu.dot_dimension_numbers<[1], [0], [0], [1], [0, 0, 1, 1], [], []>} : vector<8x8xf32>, vector<8x8xf32>, vector<8x8xf32> -> vector<8x8xf32>
    %167 = vector.extract_strided_slice %4 {offsets = [8, 0], sizes = [8, 32], strides = [1, 1]} : vector<32x32xf32> to vector<8x32xf32>
    %cst_56 = arith.constant dense<0.000000e+00> : vector<8x32xf32>
    %168 = tpu.matmul %166, %167, %cst_56 {dimension_numbers = #tpu.dot_dimension_numbers<[1], [0], [0], [1], [0, 0, 1, 1], [], []>} : vector<8x8xf32>, vector<8x32xf32>, vector<8x32xf32> -> vector<8x32xf32>
    %169 = arith.addf %151, %168 : vector<8x32xf32>
    %170 = vector.extract_strided_slice %128 {offsets = [0, 16], sizes = [8, 8], strides = [1, 1]} : vector<8x32xf32> to vector<8x8xf32>
    %171 = vector.extract_strided_slice %131 {offsets = [0, 16], sizes = [8, 8], strides = [1, 1]} : vector<8x32xf32> to vector<8x8xf32>
    %172 = vector.extract_strided_slice %134 {offsets = [0, 16], sizes = [8, 8], strides = [1, 1]} : vector<8x32xf32> to vector<8x8xf32>
    %cst_57 = arith.constant dense<0.000000e+00> : vector<8x8xf32>
    %173 = tpu.matmul %170, %171, %cst_57 {dimension_numbers = #tpu.dot_dimension_numbers<[1], [1], [0], [0], [0, 0, 1, 0], [], []>} : vector<8x8xf32>, vector<8x8xf32>, vector<8x8xf32> -> vector<8x8xf32>
    %cst_58 = arith.constant dense<0xFF800000> : vector<8xf32>
    %174 = vector.multi_reduction <maximumf>, %173, %cst_58 [1] : vector<8x8xf32> to vector<8xf32>
    %175 = vector.shape_cast %174 : vector<8xf32> to vector<8x1xf32>
    %176 = vector.broadcast %175 : vector<8x1xf32> to vector<8x8xf32>
    %177 = arith.subf %173, %176 : vector<8x8xf32>
    %178 = math.exp %177 : vector<8x8xf32>
    %cst_59 = arith.constant dense<0.000000e+00> : vector<8xf32>
    %179 = vector.multi_reduction <add>, %178, %cst_59 [1] : vector<8x8xf32> to vector<8xf32>
    %180 = vector.shape_cast %179 : vector<8xf32> to vector<8x1xf32>
    %181 = tpu.reciprocal %180 {approx = true} : vector<8x1xf32> -> vector<8x1xf32>
    %182 = vector.broadcast %181 : vector<8x1xf32> to vector<8x8xf32>
    %183 = arith.mulf %178, %182 : vector<8x8xf32>
    %cst_60 = arith.constant dense<0.000000e+00> : vector<8x8xf32>
    %184 = tpu.matmul %183, %172, %cst_60 {dimension_numbers = #tpu.dot_dimension_numbers<[1], [0], [0], [1], [0, 0, 1, 1], [], []>} : vector<8x8xf32>, vector<8x8xf32>, vector<8x8xf32> -> vector<8x8xf32>
    %185 = vector.extract_strided_slice %4 {offsets = [16, 0], sizes = [8, 32], strides = [1, 1]} : vector<32x32xf32> to vector<8x32xf32>
    %cst_61 = arith.constant dense<0.000000e+00> : vector<8x32xf32>
    %186 = tpu.matmul %184, %185, %cst_61 {dimension_numbers = #tpu.dot_dimension_numbers<[1], [0], [0], [1], [0, 0, 1, 1], [], []>} : vector<8x8xf32>, vector<8x32xf32>, vector<8x32xf32> -> vector<8x32xf32>
    %187 = arith.addf %169, %186 : vector<8x32xf32>
    %188 = vector.extract_strided_slice %128 {offsets = [0, 24], sizes = [8, 8], strides = [1, 1]} : vector<8x32xf32> to vector<8x8xf32>
    %189 = vector.extract_strided_slice %131 {offsets = [0, 24], sizes = [8, 8], strides = [1, 1]} : vector<8x32xf32> to vector<8x8xf32>
    %190 = vector.extract_strided_slice %134 {offsets = [0, 24], sizes = [8, 8], strides = [1, 1]} : vector<8x32xf32> to vector<8x8xf32>
    %cst_62 = arith.constant dense<0.000000e+00> : vector<8x8xf32>
    %191 = tpu.matmul %188, %189, %cst_62 {dimension_numbers = #tpu.dot_dimension_numbers<[1], [1], [0], [0], [0, 0, 1, 0], [], []>} : vector<8x8xf32>, vector<8x8xf32>, vector<8x8xf32> -> vector<8x8xf32>
    %cst_63 = arith.constant dense<0xFF800000> : vector<8xf32>
    %192 = vector.multi_reduction <maximumf>, %191, %cst_63 [1] : vector<8x8xf32> to vector<8xf32>
    %193 = vector.shape_cast %192 : vector<8xf32> to vector<8x1xf32>
    %194 = vector.broadcast %193 : vector<8x1xf32> to vector<8x8xf32>
    %195 = arith.subf %191, %194 : vector<8x8xf32>
    %196 = math.exp %195 : vector<8x8xf32>
    %cst_64 = arith.constant dense<0.000000e+00> : vector<8xf32>
    %197 = vector.multi_reduction <add>, %196, %cst_64 [1] : vector<8x8xf32> to vector<8xf32>
    %198 = vector.shape_cast %197 : vector<8xf32> to vector<8x1xf32>
    %199 = tpu.reciprocal %198 {approx = true} : vector<8x1xf32> -> vector<8x1xf32>
    %200 = vector.broadcast %199 : vector<8x1xf32> to vector<8x8xf32>
    %201 = arith.mulf %196, %200 : vector<8x8xf32>
    %cst_65 = arith.constant dense<0.000000e+00> : vector<8x8xf32>
    %202 = tpu.matmul %201, %190, %cst_65 {dimension_numbers = #tpu.dot_dimension_numbers<[1], [0], [0], [1], [0, 0, 1, 1], [], []>} : vector<8x8xf32>, vector<8x8xf32>, vector<8x8xf32> -> vector<8x8xf32>
    %203 = vector.extract_strided_slice %4 {offsets = [24, 0], sizes = [8, 32], strides = [1, 1]} : vector<32x32xf32> to vector<8x32xf32>
    %cst_66 = arith.constant dense<0.000000e+00> : vector<8x32xf32>
    %204 = tpu.matmul %202, %203, %cst_66 {dimension_numbers = #tpu.dot_dimension_numbers<[1], [0], [0], [1], [0, 0, 1, 1], [], []>} : vector<8x8xf32>, vector<8x32xf32>, vector<8x32xf32> -> vector<8x32xf32>
    %205 = arith.addf %187, %204 : vector<8x32xf32>
    %206 = vector.broadcast %9 : vector<1x32xf32> to vector<8x32xf32>
    %207 = arith.addf %205, %206 : vector<8x32xf32>
    %208 = arith.addf %125, %207 : vector<8x32xf32>
    %cst_67 = arith.constant dense<0.000000e+00> : vector<8xf32>
    %209 = vector.multi_reduction <add>, %208, %cst_67 [1] : vector<8x32xf32> to vector<8xf32>
    %210 = vector.shape_cast %209 : vector<8xf32> to vector<8x1xf32>
    %cst_68 = arith.constant 3.200000e+01 : f32
    %211 = vector.broadcast %cst_68 : f32 to vector<8x1xf32>
    %212 = arith.divf %210, %211 : vector<8x1xf32>
    %213 = vector.broadcast %212 : vector<8x1xf32> to vector<8x32xf32>
    %214 = arith.subf %208, %213 : vector<8x32xf32>
    %215 = arith.mulf %214, %214 : vector<8x32xf32>
    %cst_69 = arith.constant dense<0.000000e+00> : vector<8xf32>
    %216 = vector.multi_reduction <add>, %215, %cst_69 [1] : vector<8x32xf32> to vector<8xf32>
    %217 = vector.shape_cast %216 : vector<8xf32> to vector<8x1xf32>
    %cst_70 = arith.constant 3.200000e+01 : f32
    %218 = vector.broadcast %cst_70 : f32 to vector<8x1xf32>
    %219 = arith.divf %217, %218 : vector<8x1xf32>
    %cst_71 = arith.constant 9.99999974E-6 : f32
    %220 = vector.broadcast %cst_71 : f32 to vector<8x1xf32>
    %221 = arith.addf %219, %220 : vector<8x1xf32>
    %222 = math.rsqrt %221 : vector<8x1xf32>
    %223 = vector.broadcast %222 : vector<8x1xf32> to vector<8x32xf32>
    %224 = arith.mulf %214, %223 : vector<8x32xf32>
    %225 = vector.broadcast %10 : vector<1x32xf32> to vector<8x32xf32>
    %226 = arith.mulf %224, %225 : vector<8x32xf32>
    %227 = vector.broadcast %11 : vector<1x32xf32> to vector<8x32xf32>
    %228 = arith.addf %226, %227 : vector<8x32xf32>
    %c1_72 = arith.constant 1 : index
    %c0_73 = arith.constant 0 : index
    %c0_74 = arith.constant 0 : index
    %229 = vector.load %arg5[%c1_72, %c0_73, %c0_74] : memref<2x8x32xf32, #tpu.memory_space<vmem>>, vector<1x8x32xf32>
    %230 = vector.shape_cast %229 : vector<1x8x32xf32> to vector<8x32xf32>
    %231 = vector.shape_cast %228 : vector<8x32xf32> to vector<1x8x32xf32>
    tpu.vector_store %arg5[%c1_72, %c0_73, %c0_74], %231 {strides = array<i32>} : memref<2x8x32xf32, #tpu.memory_space<vmem>>, vector<1x8x32xf32>,
    return
  }
  func.func @transform_0(%arg0: i32) -> (i32, i32, i32) {
    %c0_i32 = arith.constant 0 : i32
    %c0_i32_0 = arith.constant 0 : i32
    %c0_i32_1 = arith.constant 0 : i32
    return %arg0, %c0_i32, %c0_i32_0 : i32, i32, i32
  }
  func.func @transform_1(%arg0: i32) -> (i32, i32, i32) {
    %c0_i32 = arith.constant 0 : i32
    %c0_i32_0 = arith.constant 0 : i32
    %c0_i32_1 = arith.constant 0 : i32
    return %arg0, %c0_i32, %c0_i32_0 : i32, i32, i32
  }
  func.func @transform_2(%arg0: i32) -> (i32, i32) {
    %c0_i32 = arith.constant 0 : i32
    %c0_i32_0 = arith.constant 0 : i32
    %c0_i32_1 = arith.constant 0 : i32
    return %c0_i32, %c0_i32_0 : i32, i32
  }
  func.func @transform_3(%arg0: i32) -> (i32, i32) {
    %c0_i32 = arith.constant 0 : i32
    %c0_i32_0 = arith.constant 0 : i32
    %c0_i32_1 = arith.constant 0 : i32
    return %c0_i32, %c0_i32_0 : i32, i32
  }
  func.func @transform_4(%arg0: i32) -> (i32, i32, i32) {
    %c0_i32 = arith.constant 0 : i32
    %c0_i32_0 = arith.constant 0 : i32
    %c0_i32_1 = arith.constant 0 : i32
    return %arg0, %c0_i32, %c0_i32_0 : i32, i32, i32
  }
}

</mosaic_0001>

<llo_original>
// kernel: tpu_custom_call.1
$region0: #{tpu_custom_call.1}
  #allocation0 [shape = 'u32[]', space=smem, size = 0x4, offset = 0x4, fixed_abs, tag = 'smem constant byte address 0x4 - core index']
  #allocation1 [shape = 'u32[144,128]{1,0:T(1,128)}', space=vmem, size = 0x12000, scoped, tag = 'internal scratch']
  %s0 = inlined_call_operand.hbm [shape: f32[2,8,32], index: 0, kind: input, shape index: {}]
  %s1 = inlined_call_operand.hbm [shape: f32[2,8,32], index: 1, kind: input, shape index: {}]
  %s2 = inlined_call_operand.hbm [shape: f32[32,128], index: 2, kind: input, shape index: {}]
  %s3 = inlined_call_operand.vmem [shape: f32[8,32], index: 3, kind: input, shape index: {}]
  %s4 = inlined_call_operand.hbm [shape: f32[2,8,32], index: 4, kind: output, shape index: {}]
  %s5 = sld [smem:[#allocation0]]
  $region38: #{tpu_custom_call.1} parent=0
    _
  %s7 = ssub.s32 1, %s5
  %s8 = scalar_select 0, %s7, %s5
  $region1: #{tpu_custom_call.1} parent=0
    #allocation2 [shape = 'u8[8192]{0}', space=vmem, size = 0x2000, scoped, tag = 'input window, operand 0, single buffered']
    #allocation3 [shape = 's32[1]{0}', space=sflag, size = 0x4, scoped, tag = 'scoped memory for tpu_custom_call.1']
    #allocation4 [shape = 's32[1]{0}', space=sflag, size = 0x4, scoped, tag = 'scoped memory for tpu_custom_call.1']
    #allocation5 [shape = 'u8[8192]{0}', space=vmem, size = 0x2000, scoped, tag = 'input window, operand 1, single buffered']
    #allocation6 [shape = 's32[1]{0}', space=sflag, size = 0x4, scoped, tag = 'scoped memory for tpu_custom_call.1']
    #allocation7 [shape = 'u8[16384]{0}', space=vmem, size = 0x4000, scoped, tag = 'input window, operand 2, single buffered']
    #allocation8 [shape = 'u8[8192]{0}', space=vmem, size = 0x2000, scoped, tag = 'output window, operand 0, single buffered']
    %9 = vsyncpa [#allocation3], 0
    %10 = vsyncpa [#allocation6], 0
    %11 = vsyncpa [#allocation4], 0
    // Predicated region
    $region2: #{tpu_custom_call.1} parent=1 // pred_check
      _
    $region3: #{tpu_custom_call.1} parent=1 // pred_check_branch
      %13 = sbr.rel (0) target = $region5
    $region4: #{tpu_custom_call.1} parent=1 // pred_region
      %s15 = ssub.s32 256, 256
      %16 = vsyncadd [#allocation3], %s15
      %s17 = sshll.u32 [#allocation2], 4
      %s18 = int_to_ptr.vmem [resolvable:$true] %s17
      %23 = dma.hbm_to_vmem [thread:$0]  %s0, 256, %s18, [#allocation3], 128, 128, 8
    $region5: #{tpu_custom_call.1} parent=1 // pred_fallthru
      _
    // Predicated region
    $region6: #{tpu_custom_call.1} parent=1 // pred_check
      _
    $region7: #{tpu_custom_call.1} parent=1 // pred_check_branch
      %25 = sbr.rel (0) target = $region9
    $region8: #{tpu_custom_call.1} parent=1 // pred_region
      %s27 = ssub.s32 256, 256
      %28 = vsyncadd [#allocation6], %s27
      %s29 = sshll.u32 [#allocation5], 4
      %s30 = int_to_ptr.vmem [resolvable:$true] %s29
      %35 = dma.hbm_to_vmem [thread:$0]  %s1, 256, %s30, [#allocation6], 128, 128, 8
    $region9: #{tpu_custom_call.1} parent=1 // pred_fallthru
      _
    // Predicated region
    $region10: #{tpu_custom_call.1} parent=1 // pred_check
      _
    $region11: #{tpu_custom_call.1} parent=1 // pred_check_branch
      %37 = sbr.rel (0) target = $region13
    $region12: #{tpu_custom_call.1} parent=1 // pred_region
      %s39 = ssub.s32 512, 512
      %40 = vsyncadd [#allocation6], %s39
      %s41 = sshll.u32 [#allocation7], 4
      %s42 = int_to_ptr.vmem [resolvable:$true] %s41
      %47 = dma.hbm_to_vmem [thread:$0]  %s2, 512, %s42, [#allocation6], 128, 128, 8
    $region13: #{tpu_custom_call.1} parent=1 // pred_fallthru
      _
    // Predicated region
    $region14: #{tpu_custom_call.1} parent=1 // pred_check
      _
    $region15: #{tpu_custom_call.1} parent=1 // pred_check_branch
      %49 = sbr.rel (0) target = $region17
    $region16: #{tpu_custom_call.1} parent=1 // pred_region
      _
    $region17: #{tpu_custom_call.1} parent=1 // pred_fallthru
      _
    // Predicated region
    $region18: #{tpu_custom_call.1} parent=1 // pred_check
      _
    $region19: #{tpu_custom_call.1} parent=1 // pred_check_branch
      %51 = sbr.rel (0) target = $region21
    $region20: #{tpu_custom_call.1} parent=1 // pred_region
      %52 = dma.done [#allocation3], 256
    $region21: #{tpu_custom_call.1} parent=1 // pred_fallthru
      _
    // Predicated region
    $region22: #{tpu_custom_call.1} parent=1 // pred_check
      _
    $region23: #{tpu_custom_call.1} parent=1 // pred_check_branch
      %54 = sbr.rel (0) target = $region25
    $region24: #{tpu_custom_call.1} parent=1 // pred_region
      %55 = dma.done [#allocation6], 256
    $region25: #{tpu_custom_call.1} parent=1 // pred_fallthru
      _
    // Predicated region
    $region26: #{tpu_custom_call.1} parent=1 // pred_check
      _
    $region27: #{tpu_custom_call.1} parent=1 // pred_check_branch
      %57 = sbr.rel (0) target = $region29
    $region28: #{tpu_custom_call.1} parent=1 // pred_region
      %58 = dma.done [#allocation6], 512
    $region29: #{tpu_custom_call.1} parent=1 // pred_fallthru
      _
    %v59 = vld [vmem:[#allocation7] sm:$0xff]
    %v60 = vld [vmem:[#allocation7 + $0x8] sm:$0xff]
    %v61 = vld [vmem:[#allocation7 + $0x10] sm:$0xff]
    %v62 = vld [vmem:[#allocation7 + $0x18] sm:$0xff]
    %v63 = vld [vmem:[%s3] sm:$0xff]
    %v64 = vld [vmem:[#allocation2] sm:$0xff]
    %v65 = vld [vmem:[#allocation5] sm:$0xff]
    %v66 = vlaneseq
    %v67 = vshrl.u32 %v66, 7
    %v68 = vsub.s32 0, %v67
    %v69 = vrot.slane %v63, %v68
    %vm70 = vcmask 261120
    %v72 = vsel %vm70, %v64, 0
    %74 = vmatprep.subr.mxu0 0.0
    %75 = vmatpush1.msra.mxu0 %v59
    %76 = vmatprep.subr.mxu0 0.0
    %77 = vmatpush1.msra.mxu0 %v60
    %78 = vmatprep.subr.mxu0 0.0
    %79 = vmatpush1.msra.mxu0 %v61
    %80 = vmatprep.subr.mxu0 0.0
    %81 = vmatpush1.msra.mxu0 %v62
    %82 = vmatprep.subr.mxu0 0.0
    %83 = vmatpush1.msra.mxu0 0.0
    %84 = vmatprep.subr.mxu0 0.0
    %85 = vmatpush1.msra.mxu0 0.0
    %86 = vmatprep.subr.mxu0 0.0
    %87 = vmatpush1.msra.mxu0 0.0
    %88 = vmatprep.subr.mxu0 0.0
    %89 = vmatpush1.msra.mxu0 0.0
    %90 = vmatprep.subr.mxu0 0.0
    %91 = vmatpush1.msra.mxu0 0.0
    %92 = vmatprep.subr.mxu0 0.0
    %93 = vmatpush1.msra.mxu0 0.0
    %94 = vmatprep.subr.mxu0 0.0
    %95 = vmatpush1.msra.mxu0 0.0
    %96 = vmatprep.subr.mxu0 0.0
    %97 = vmatpush1.msra.mxu0 0.0
    %98 = vmatprep.subr.mxu0 0.0
    %99 = vmatpush1.msra.mxu0 0.0
    %100 = vmatprep.subr.mxu0 0.0
    %101 = vmatpush1.msra.mxu0 0.0
    %102 = vmatprep.subr.mxu0 0.0
    %103 = vmatpush1.msra.mxu0 0.0
    %104 = vmatprep.subr.mxu0 0.0
    %105 = vmatpush1.msra.mxu0 0.0
    %106 = vmatprep.subr.mxu0 0.0
    %107 = vmatpush1.msra.mxu0 0.0
    %108 = vmatprep.subr.mxu0 0.0
    %109 = vmatpush1.msra.mxu0 0.0
    %110 = vmatprep.subr.mxu0 0.0
    %111 = vmatpush1.msra.mxu0 0.0
    %112 = vmatprep.subr.mxu0 0.0
    %113 = vmatpush1.msra.mxu0 0.0
    %114 = vmatprep.subr.mxu0 0.0
    %115 = vmatpush1.msra.mxu0 0.0
    %116 = vmatprep.subr.mxu0 0.0
    %117 = vmatpush1.msra.mxu0 0.0
    %118 = vmatprep.subr.mxu0 0.0
    %119 = vmatpush1.msra.mxu0 0.0
    %120 = vmatprep.subr.mxu0 0.0
    %121 = vmatpush1.msra.mxu0 0.0
    %122 = vmatprep.subr.mxu0 0.0
    %123 = vmatpush1.msra.mxu0 0.0
    %124 = vmatprep.subr.mxu0 0.0
    %125 = vmatpush1.msra.mxu0 0.0
    %126 = vmatprep.subr.mxu0 0.0
    %127 = vmatpush1.msra.mxu0 0.0
    %128 = vmatprep.subr.mxu0 0.0
    %129 = vmatpush1.msra.mxu0 0.0
    %130 = vmatprep.subr.mxu0 0.0
    %131 = vmatpush1.msra.mxu0 0.0
    %132 = vmatprep.subr.mxu0 0.0
    %133 = vmatpush1.msra.mxu0 0.0
    %134 = vmatprep.subr.mxu0 0.0
    %135 = vmatpush1.msra.mxu0 0.0
    %136 = vmatprep.subr.mxu0 0.0
    %137 = vmatpush1.msra.mxu0 0.0
    %138 = vmatprep.mubr.f32.mxu0 0.0
    %139 = vmatmul.mubr.f32.gmra.mrb[0].mxu0 %v72
    %v140 = vpop.f32.mrb[0].mxu0
    %v141 = vadd.f32 %v69, %v140
    %v142 = vpop.f32.mrb[0].mxu0
    %143 = vdwg.mxu0
    %v144 = vlaneseq
    %v145 = vshrl.u32 %v144, 7
    %v146 = vsub.s32 1, %v145
    %v147 = vrot.slane %v63, %v146
    %152 = vrot.lane.b32.xlu0 %v59, 96
    %v153 = vpop.permute.xlu0 %152
    %154 = vrot.lane.b32.xlu0 %v60, 96
    %v155 = vpop.permute.xlu0 %154
    %156 = vrot.lane.b32.xlu0 %v61, 96
    %v157 = vpop.permute.xlu0 %156
    %158 = vrot.lane.b32.xlu0 %v62, 96
    %v159 = vpop.permute.xlu0 %158
    %164 = vmatprep.subr.mxu0 0.0
    %165 = vmatpush1.msra.mxu0 %v153
    %166 = vmatprep.subr.mxu0 0.0
    %167 = vmatpush1.msra.mxu0 %v155
    %168 = vmatprep.subr.mxu0 0.0
    %169 = vmatpush1.msra.mxu0 %v157
    %170 = vmatprep.subr.mxu0 0.0
    %171 = vmatpush1.msra.mxu0 %v159
    %172 = vmatprep.subr.mxu0 0.0
    %173 = vmatpush1.msra.mxu0 0.0
    %174 = vmatprep.subr.mxu0 0.0
    %175 = vmatpush1.msra.mxu0 0.0
    %176 = vmatprep.subr.mxu0 0.0
    %177 = vmatpush1.msra.mxu0 0.0
    %178 = vmatprep.subr.mxu0 0.0
    %179 = vmatpush1.msra.mxu0 0.0
    %180 = vmatprep.subr.mxu0 0.0
    %181 = vmatpush1.msra.mxu0 0.0
    %182 = vmatprep.subr.mxu0 0.0
    %183 = vmatpush1.msra.mxu0 0.0
    %184 = vmatprep.subr.mxu0 0.0
    %185 = vmatpush1.msra.mxu0 0.0
    %186 = vmatprep.subr.mxu0 0.0
    %187 = vmatpush1.msra.mxu0 0.0
    %188 = vmatprep.subr.mxu0 0.0
    %189 = vmatpush1.msra.mxu0 0.0
    %190 = vmatprep.subr.mxu0 0.0
    %191 = vmatpush1.msra.mxu0 0.0
    %192 = vmatprep.subr.mxu0 0.0
    %193 = vmatpush1.msra.mxu0 0.0
    %194 = vmatprep.subr.mxu0 0.0
    %195 = vmatpush1.msra.mxu0 0.0
    %196 = vmatprep.subr.mxu0 0.0
    %197 = vmatpush1.msra.mxu0 0.0
    %198 = vmatprep.subr.mxu0 0.0
    %199 = vmatpush1.msra.mxu0 0.0
    %200 = vmatprep.subr.mxu0 0.0
    %201 = vmatpush1.msra.mxu0 0.0
    %202 = vmatprep.subr.mxu0 0.0
    %203 = vmatpush1.msra.mxu0 0.0
    %204 = vmatprep.subr.mxu0 0.0
    %205 = vmatpush1.msra.mxu0 0.0
    %206 = vmatprep.subr.mxu0 0.0
    %207 = vmatpush1.msra.mxu0 0.0
    %208 = vmatprep.subr.mxu0 0.0
    %209 = vmatpush1.msra.mxu0 0.0
    %210 = vmatprep.subr.mxu0 0.0
    %211 = vmatpush1.msra.mxu0 0.0
    %212 = vmatprep.subr.mxu0 0.0
    %213 = vmatpush1.msra.mxu0 0.0
    %214 = vmatprep.subr.mxu0 0.0
    %215 = vmatpush1.msra.mxu0 0.0
    %216 = vmatprep.subr.mxu0 0.0
    %217 = vmatpush1.msra.mxu0 0.0
    %218 = vmatprep.subr.mxu0 0.0
    %219 = vmatpush1.msra.mxu0 0.0
    %220 = vmatprep.subr.mxu0 0.0
    %221 = vmatpush1.msra.mxu0 0.0
    %222 = vmatprep.subr.mxu0 0.0
    %223 = vmatpush1.msra.mxu0 0.0
    %224 = vmatprep.subr.mxu0 0.0
    %225 = vmatpush1.msra.mxu0 0.0
    %226 = vmatprep.subr.mxu0 0.0
    %227 = vmatpush1.msra.mxu0 0.0
    %228 = vmatprep.mubr.f32.mxu0 0.0
    %229 = vmatmul.mubr.f32.gmra.mrb[0].mxu0 %v72
    %v230 = vpop.f32.mrb[0].mxu0
    %v231 = vadd.f32 %v147, %v230
    %v232 = vpop.f32.mrb[0].mxu0
    %233 = vdwg.mxu0
    %v234 = vlaneseq
    %v235 = vshrl.u32 %v234, 7
    %v236 = vsub.s32 2, %v235
    %v237 = vrot.slane %v63, %v236
    %238 = vrot.lane.b32.xlu0 %v59, 64
    %v239 = vpop.permute.xlu0 %238
    %240 = vrot.lane.b32.xlu0 %v60, 64
    %v241 = vpop.permute.xlu0 %240
    %242 = vrot.lane.b32.xlu0 %v61, 64
    %v243 = vpop.permute.xlu0 %242
    %244 = vrot.lane.b32.xlu0 %v62, 64
    %v245 = vpop.permute.xlu0 %244
    %v251 = vsel %vm70, %v65, 0
    %253 = vmatprep.subr.mxu0 0.0
    %254 = vmatpush1.msra.mxu0 %v239
    %255 = vmatprep.subr.mxu0 0.0
    %256 = vmatpush1.msra.mxu0 %v241
    %257 = vmatprep.subr.mxu0 0.0
    %258 = vmatpush1.msra.mxu0 %v243
    %259 = vmatprep.subr.mxu0 0.0
    %260 = vmatpush1.msra.mxu0 %v245
    %261 = vmatprep.subr.mxu0 0.0
    %262 = vmatpush1.msra.mxu0 0.0
    %263 = vmatprep.subr.mxu0 0.0
    %264 = vmatpush1.msra.mxu0 0.0
    %265 = vmatprep.subr.mxu0 0.0
    %266 = vmatpush1.msra.mxu0 0.0
    %267 = vmatprep.subr.mxu0 0.0
    %268 = vmatpush1.msra.mxu0 0.0
    %269 = vmatprep.subr.mxu0 0.0
    %270 = vmatpush1.msra.mxu0 0.0
    %271 = vmatprep.subr.mxu0 0.0
    %272 = vmatpush1.msra.mxu0 0.0
    %273 = vmatprep.subr.mxu0 0.0
    %274 = vmatpush1.msra.mxu0 0.0
    %275 = vmatprep.subr.mxu0 0.0
    %276 = vmatpush1.msra.mxu0 0.0
    %277 = vmatprep.subr.mxu0 0.0
    %278 = vmatpush1.msra.mxu0 0.0
    %279 = vmatprep.subr.mxu0 0.0
    %280 = vmatpush1.msra.mxu0 0.0
    %281 = vmatprep.subr.mxu0 0.0
    %282 = vmatpush1.msra.mxu0 0.0
    %283 = vmatprep.subr.mxu0 0.0
    %284 = vmatpush1.msra.mxu0 0.0
    %285 = vmatprep.subr.mxu0 0.0
    %286 = vmatpush1.msra.mxu0 0.0
    %287 = vmatprep.subr.mxu0 0.0
    %288 = vmatpush1.msra.mxu0 0.0
    %289 = vmatprep.subr.mxu0 0.0
    %290 = vmatpush1.msra.mxu0 0.0
    %291 = vmatprep.subr.mxu0 0.0
    %292 = vmatpush1.msra.mxu0 0.0
    %293 = vmatprep.subr.mxu0 0.0
    %294 = vmatpush1.msra.mxu0 0.0
    %295 = vmatprep.subr.mxu0 0.0
    %296 = vmatpush1.msra.mxu0 0.0
    %297 = vmatprep.subr.mxu0 0.0
    %298 = vmatpush1.msra.mxu0 0.0
    %299 = vmatprep.subr.mxu0 0.0
    %300 = vmatpush1.msra.mxu0 0.0
    %301 = vmatprep.subr.mxu0 0.0
    %302 = vmatpush1.msra.mxu0 0.0
    %303 = vmatprep.subr.mxu0 0.0
    %304 = vmatpush1.msra.mxu0 0.0
    %305 = vmatprep.subr.mxu0 0.0
    %306 = vmatpush1.msra.mxu0 0.0
    %307 = vmatprep.subr.mxu0 0.0
    %308 = vmatpush1.msra.mxu0 0.0
    %309 = vmatprep.subr.mxu0 0.0
    %310 = vmatpush1.msra.mxu0 0.0
    %311 = vmatprep.subr.mxu0 0.0
    %312 = vmatpush1.msra.mxu0 0.0
    %313 = vmatprep.subr.mxu0 0.0
    %314 = vmatpush1.msra.mxu0 0.0
    %315 = vmatprep.subr.mxu0 0.0
    %316 = vmatpush1.msra.mxu0 0.0
    %317 = vmatprep.mubr.f32.mxu0 0.0
    %318 = vmatmul.mubr.f32.gmra.mrb[0].mxu0 %v251
    %v319 = vpop.f32.mrb[0].mxu0
    %v320 = vadd.f32 %v237, %v319
    %v321 = vpop.f32.mrb[0].mxu0
    %322 = vdwg.mxu0
    %vm323 = vcmask 64512
    %v325 = vsel %vm323, %v141, 0
    %v328 = vsel %vm323, %v231, 0
    %330 = vmatprep.subr.mxu0 0.0
    %331 = vmatpush1.xpose.msra.mxu0 %v328
    %332 = vmatprep.subr.mxu0 0.0
    %333 = vmatpush1.xpose.msra.mxu0 0.0
    %334 = vmatprep.subr.mxu0 0.0
    %335 = vmatpush1.xpose.msra.mxu0 0.0
    %336 = vmatprep.subr.mxu0 0.0
    %337 = vmatpush1.xpose.msra.mxu0 0.0
    %338 = vmatprep.subr.mxu0 0.0
    %339 = vmatpush1.xpose.msra.mxu0 0.0
    %340 = vmatprep.subr.mxu0 0.0
    %341 = vmatpush1.xpose.msra.mxu0 0.0
    %342 = vmatprep.subr.mxu0 0.0
    %343 = vmatpush1.xpose.msra.mxu0 0.0
    %344 = vmatprep.subr.mxu0 0.0
    %345 = vmatpush1.xpose.msra.mxu0 0.0
    %346 = vmatprep.subr.mxu0 0.0
    %347 = vmatpush1.xpose.msra.mxu0 0.0
    %348 = vmatprep.subr.mxu0 0.0
    %349 = vmatpush1.xpose.msra.mxu0 0.0
    %350 = vmatprep.subr.mxu0 0.0
    %351 = vmatpush1.xpose.msra.mxu0 0.0
    %352 = vmatprep.subr.mxu0 0.0
    %353 = vmatpush1.xpose.msra.mxu0 0.0
    %354 = vmatprep.subr.mxu0 0.0
    %355 = vmatpush1.xpose.msra.mxu0 0.0
    %356 = vmatprep.subr.mxu0 0.0
    %357 = vmatpush1.xpose.msra.mxu0 0.0
    %358 = vmatprep.subr.mxu0 0.0
    %359 = vmatpush1.xpose.msra.mxu0 0.0
    %360 = vmatprep.subr.mxu0 0.0
    %361 = vmatpush1.xpose.msra.mxu0 0.0
    %362 = vmatprep.subr.mxu0 0.0
    %363 = vmatpush1.xpose.msra.mxu0 0.0
    %364 = vmatprep.subr.mxu0 0.0
    %365 = vmatpush1.xpose.msra.mxu0 0.0
    %366 = vmatprep.subr.mxu0 0.0
    %367 = vmatpush1.xpose.msra.mxu0 0.0
    %368 = vmatprep.subr.mxu0 0.0
    %369 = vmatpush1.xpose.msra.mxu0 0.0
    %370 = vmatprep.subr.mxu0 0.0
    %371 = vmatpush1.xpose.msra.mxu0 0.0
    %372 = vmatprep.subr.mxu0 0.0
    %373 = vmatpush1.xpose.msra.mxu0 0.0
    %374 = vmatprep.subr.mxu0 0.0
    %375 = vmatpush1.xpose.msra.mxu0 0.0
    %376 = vmatprep.subr.mxu0 0.0
    %377 = vmatpush1.xpose.msra.mxu0 0.0
    %378 = vmatprep.subr.mxu0 0.0
    %379 = vmatpush1.xpose.msra.mxu0 0.0
    %380 = vmatprep.subr.mxu0 0.0
    %381 = vmatpush1.xpose.msra.mxu0 0.0
    %382 = vmatprep.subr.mxu0 0.0
    %383 = vmatpush1.xpose.msra.mxu0 0.0
    %384 = vmatprep.subr.mxu0 0.0
    %385 = vmatpush1.xpose.msra.mxu0 0.0
    %386 = vmatprep.subr.mxu0 0.0
    %387 = vmatpush1.xpose.msra.mxu0 0.0
    %388 = vmatprep.subr.mxu0 0.0
    %389 = vmatpush1.xpose.msra.mxu0 0.0
    %390 = vmatprep.subr.mxu0 0.0
    %391 = vmatpush1.xpose.msra.mxu0 0.0
    %392 = vmatprep.subr.mxu0 0.0
    %393 = vmatpush1.xpose.msra.mxu0 0.0
    %394 = vmatprep.mubr.f32.mxu0 0.0
    %395 = vmatmul.mubr.f32.gmra.mrb[0].mxu0 %v325
    %v396 = vpop.f32.mrb[0].mxu0
    %v397 = vadd.f32 0.0, %v396
    %v398 = vpop.f32.mrb[0].mxu0
    %399 = vdwg.mxu0
    %v400 = vsel %vm323, %v397, -inf
    %401 = vmax.xlane.f32.xlu0 %v400
    %v402 = vpop.xlane.xlu0 %401
    %v403 = vsub.f32 %v397, %v402
    %v404 = vmul.f32 %v403, 1.442695
    %v405 = vpow.pop %v404
    %v406 = vsel %vm323, %v405, 0.0
    %407 = vadd.xlane.f32.xlu0 %v406
    %v408 = vpop.xlane.xlu0 %407
    %v409 = vrcp.pop %v408
    %v410 = vmul.f32 %v405, %v409
    %v412 = vsel %vm323, %v410, 0
    %414 = vmatprep.subr.mxu0 0.0
    %415 = vmatpush1.msra.mxu0 %v320
    %416 = vmatprep.subr.mxu0 0.0
    %417 = vmatpush1.msra.mxu0 0.0
    %418 = vmatprep.subr.mxu0 0.0
    %419 = vmatpush1.msra.mxu0 0.0
    %420 = vmatprep.subr.mxu0 0.0
    %421 = vmatpush1.msra.mxu0 0.0
    %422 = vmatprep.subr.mxu0 0.0
    %423 = vmatpush1.msra.mxu0 0.0
    %424 = vmatprep.subr.mxu0 0.0
    %425 = vmatpush1.msra.mxu0 0.0
    %426 = vmatprep.subr.mxu0 0.0
    %427 = vmatpush1.msra.mxu0 0.0
    %428 = vmatprep.subr.mxu0 0.0
    %429 = vmatpush1.msra.mxu0 0.0
    %430 = vmatprep.subr.mxu0 0.0
    %431 = vmatpush1.msra.mxu0 0.0
    %432 = vmatprep.subr.mxu0 0.0
    %433 = vmatpush1.msra.mxu0 0.0
    %434 = vmatprep.subr.mxu0 0.0
    %435 = vmatpush1.msra.mxu0 0.0
    %436 = vmatprep.subr.mxu0 0.0
    %437 = vmatpush1.msra.mxu0 0.0
    %438 = vmatprep.subr.mxu0 0.0
    %439 = vmatpush1.msra.mxu0 0.0
    %440 = vmatprep.subr.mxu0 0.0
    %441 = vmatpush1.msra.mxu0 0.0
    %442 = vmatprep.subr.mxu0 0.0
    %443 = vmatpush1.msra.mxu0 0.0
    %444 = vmatprep.subr.mxu0 0.0
    %445 = vmatpush1.msra.mxu0 0.0
    %446 = vmatprep.subr.mxu0 0.0
    %447 = vmatpush1.msra.mxu0 0.0
    %448 = vmatprep.subr.mxu0 0.0
    %449 = vmatpush1.msra.mxu0 0.0
    %450 = vmatprep.subr.mxu0 0.0
    %451 = vmatpush1.msra.mxu0 0.0
    %452 = vmatprep.subr.mxu0 0.0
    %453 = vmatpush1.msra.mxu0 0.0
    %454 = vmatprep.subr.mxu0 0.0
    %455 = vmatpush1.msra.mxu0 0.0
    %456 = vmatprep.subr.mxu0 0.0
    %457 = vmatpush1.msra.mxu0 0.0
    %458 = vmatprep.subr.mxu0 0.0
    %459 = vmatpush1.msra.mxu0 0.0
    %460 = vmatprep.subr.mxu0 0.0
    %461 = vmatpush1.msra.mxu0 0.0
    %462 = vmatprep.subr.mxu0 0.0
    %463 = vmatpush1.msra.mxu0 0.0
    %464 = vmatprep.subr.mxu0 0.0
    %465 = vmatpush1.msra.mxu0 0.0
    %466 = vmatprep.subr.mxu0 0.0
    %467 = vmatpush1.msra.mxu0 0.0
    %468 = vmatprep.subr.mxu0 0.0
    %469 = vmatpush1.msra.mxu0 0.0
    %470 = vmatprep.subr.mxu0 0.0
    %471 = vmatpush1.msra.mxu0 0.0
    %472 = vmatprep.subr.mxu0 0.0
    %473 = vmatpush1.msra.mxu0 0.0
    %474 = vmatprep.subr.mxu0 0.0
    %475 = vmatpush1.msra.mxu0 0.0
    %476 = vmatprep.subr.mxu0 0.0
    %477 = vmatpush1.msra.mxu0 0.0
    %478 = vmatprep.mubr.f32.mxu0 0.0
    %479 = vmatmul.mubr.f32.gmra.mrb[0].mxu0 %v412
    %v480 = vpop.f32.mrb[0].mxu0
    %v481 = vadd.f32 0.0, %v480
    %v482 = vpop.f32.mrb[0].mxu0
    %483 = vdwg.mxu0
    %484 = vrot.lane.b32.xlu0 %v141, 120
    %v485 = vpop.permute.xlu0 %484
    %486 = vrot.lane.b32.xlu0 %v231, 120
    %v487 = vpop.permute.xlu0 %486
    %v488 = vsel %vm323, %v485, 0
    %v490 = vsel %vm323, %v487, 0
    %492 = vmatprep.subr.mxu0 0.0
    %493 = vmatpush1.xpose.msra.mxu0 %v490
    %494 = vmatprep.subr.mxu0 0.0
    %495 = vmatpush1.xpose.msra.mxu0 0.0
    %496 = vmatprep.subr.mxu0 0.0
    %497 = vmatpush1.xpose.msra.mxu0 0.0
    %498 = vmatprep.subr.mxu0 0.0
    %499 = vmatpush1.xpose.msra.mxu0 0.0
    %500 = vmatprep.subr.mxu0 0.0
    %501 = vmatpush1.xpose.msra.mxu0 0.0
    %502 = vmatprep.subr.mxu0 0.0
    %503 = vmatpush1.xpose.msra.mxu0 0.0
    %504 = vmatprep.subr.mxu0 0.0
    %505 = vmatpush1.xpose.msra.mxu0 0.0
    %506 = vmatprep.subr.mxu0 0.0
    %507 = vmatpush1.xpose.msra.mxu0 0.0
    %508 = vmatprep.subr.mxu0 0.0
    %509 = vmatpush1.xpose.msra.mxu0 0.0
    %510 = vmatprep.subr.mxu0 0.0
    %511 = vmatpush1.xpose.msra.mxu0 0.0
    %512 = vmatprep.subr.mxu0 0.0
    %513 = vmatpush1.xpose.msra.mxu0 0.0
    %514 = vmatprep.subr.mxu0 0.0
    %515 = vmatpush1.xpose.msra.mxu0 0.0
    %516 = vmatprep.subr.mxu0 0.0
    %517 = vmatpush1.xpose.msra.mxu0 0.0
    %518 = vmatprep.subr.mxu0 0.0
    %519 = vmatpush1.xpose.msra.mxu0 0.0
    %520 = vmatprep.subr.mxu0 0.0
    %521 = vmatpush1.xpose.msra.mxu0 0.0
    %522 = vmatprep.subr.mxu0 0.0
    %523 = vmatpush1.xpose.msra.mxu0 0.0
    %524 = vmatprep.subr.mxu0 0.0
    %525 = vmatpush1.xpose.msra.mxu0 0.0
    %526 = vmatprep.subr.mxu0 0.0
    %527 = vmatpush1.xpose.msra.mxu0 0.0
    %528 = vmatprep.subr.mxu0 0.0
    %529 = vmatpush1.xpose.msra.mxu0 0.0
    %530 = vmatprep.subr.mxu0 0.0
    %531 = vmatpush1.xpose.msra.mxu0 0.0
    %532 = vmatprep.subr.mxu0 0.0
    %533 = vmatpush1.xpose.msra.mxu0 0.0
    %534 = vmatprep.subr.mxu0 0.0
    %535 = vmatpush1.xpose.msra.mxu0 0.0
    %536 = vmatprep.subr.mxu0 0.0
    %537 = vmatpush1.xpose.msra.mxu0 0.0
    %538 = vmatprep.subr.mxu0 0.0
    %539 = vmatpush1.xpose.msra.mxu0 0.0
    %540 = vmatprep.subr.mxu0 0.0
    %541 = vmatpush1.xpose.msra.mxu0 0.0
    %542 = vmatprep.subr.mxu0 0.0
    %543 = vmatpush1.xpose.msra.mxu0 0.0
    %544 = vmatprep.subr.mxu0 0.0
    %545 = vmatpush1.xpose.msra.mxu0 0.0
    %546 = vmatprep.subr.mxu0 0.0
    %547 = vmatpush1.xpose.msra.mxu0 0.0
    %548 = vmatprep.subr.mxu0 0.0
    %549 = vmatpush1.xpose.msra.mxu0 0.0
    %550 = vmatprep.subr.mxu0 0.0
    %551 = vmatpush1.xpose.msra.mxu0 0.0
    %552 = vmatprep.subr.mxu0 0.0
    %553 = vmatpush1.xpose.msra.mxu0 0.0
    %554 = vmatprep.subr.mxu0 0.0
    %555 = vmatpush1.xpose.msra.mxu0 0.0
    %556 = vmatprep.mubr.f32.mxu0 0.0
    %557 = vmatmul.mubr.f32.gmra.mrb[0].mxu0 %v488
    %v558 = vpop.f32.mrb[0].mxu0
    %v559 = vadd.f32 0.0, %v558
    %v560 = vpop.f32.mrb[0].mxu0
    %561 = vdwg.mxu0
    %v562 = vsel %vm323, %v559, -inf
    %563 = vmax.xlane.f32.xlu0 %v562
    %v564 = vpop.xlane.xlu0 %563
    %v565 = vsub.f32 %v559, %v564
    %v566 = vmul.f32 %v565, 1.442695
    %v567 = vpow.pop %v566
    %v568 = vsel %vm323, %v567, 0.0
    %569 = vadd.xlane.f32.xlu0 %v568
    %v570 = vpop.xlane.xlu0 %569
    %v571 = vrcp.pop %v570
    %v572 = vmul.f32 %v567, %v571
    %574 = vrot.lane.b32.xlu0 %v320, 120
    %v575 = vpop.permute.xlu0 %574
    %v578 = vsel %vm323, %v572, 0
    %580 = vmatprep.subr.mxu0 0.0
    %581 = vmatpush1.msra.mxu0 %v575
    %582 = vmatprep.subr.mxu0 0.0
    %583 = vmatpush1.msra.mxu0 0.0
    %584 = vmatprep.subr.mxu0 0.0
    %585 = vmatpush1.msra.mxu0 0.0
    %586 = vmatprep.subr.mxu0 0.0
    %587 = vmatpush1.msra.mxu0 0.0
    %588 = vmatprep.subr.mxu0 0.0
    %589 = vmatpush1.msra.mxu0 0.0
    %590 = vmatprep.subr.mxu0 0.0
    %591 = vmatpush1.msra.mxu0 0.0
    %592 = vmatprep.subr.mxu0 0.0
    %593 = vmatpush1.msra.mxu0 0.0
    %594 = vmatprep.subr.mxu0 0.0
    %595 = vmatpush1.msra.mxu0 0.0
    %596 = vmatprep.subr.mxu0 0.0
    %597 = vmatpush1.msra.mxu0 0.0
    %598 = vmatprep.subr.mxu0 0.0
    %599 = vmatpush1.msra.mxu0 0.0
    %600 = vmatprep.subr.mxu0 0.0
    %601 = vmatpush1.msra.mxu0 0.0
    %602 = vmatprep.subr.mxu0 0.0
    %603 = vmatpush1.msra.mxu0 0.0
    %604 = vmatprep.subr.mxu0 0.0
    %605 = vmatpush1.msra.mxu0 0.0
    %606 = vmatprep.subr.mxu0 0.0
    %607 = vmatpush1.msra.mxu0 0.0
    %608 = vmatprep.subr.mxu0 0.0
    %609 = vmatpush1.msra.mxu0 0.0
    %610 = vmatprep.subr.mxu0 0.0
    %611 = vmatpush1.msra.mxu0 0.0
    %612 = vmatprep.subr.mxu0 0.0
    %613 = vmatpush1.msra.mxu0 0.0
    %614 = vmatprep.subr.mxu0 0.0
    %615 = vmatpush1.msra.mxu0 0.0
    %616 = vmatprep.subr.mxu0 0.0
    %617 = vmatpush1.msra.mxu0 0.0
    %618 = vmatprep.subr.mxu0 0.0
    %619 = vmatpush1.msra.mxu0 0.0
    %620 = vmatprep.subr.mxu0 0.0
    %621 = vmatpush1.msra.mxu0 0.0
    %622 = vmatprep.subr.mxu0 0.0
    %623 = vmatpush1.msra.mxu0 0.0
    %624 = vmatprep.subr.mxu0 0.0
    %625 = vmatpush1.msra.mxu0 0.0
    %626 = vmatprep.subr.mxu0 0.0
    %627 = vmatpush1.msra.mxu0 0.0
    %628 = vmatprep.subr.mxu0 0.0
    %629 = vmatpush1.msra.mxu0 0.0
    %630 = vmatprep.subr.mxu0 0.0
    %631 = vmatpush1.msra.mxu0 0.0
    %632 = vmatprep.subr.mxu0 0.0
    %633 = vmatpush1.msra.mxu0 0.0
    %634 = vmatprep.subr.mxu0 0.0
    %635 = vmatpush1.msra.mxu0 0.0
    %636 = vmatprep.subr.mxu0 0.0
    %637 = vmatpush1.msra.mxu0 0.0
    %638 = vmatprep.subr.mxu0 0.0
    %639 = vmatpush1.msra.mxu0 0.0
    %640 = vmatprep.subr.mxu0 0.0
    %641 = vmatpush1.msra.mxu0 0.0
    %642 = vmatprep.subr.mxu0 0.0
    %643 = vmatpush1.msra.mxu0 0.0
    %644 = vmatprep.mubr.f32.mxu0 0.0
    %645 = vmatmul.mubr.f32.gmra.mrb[0].mxu0 %v578
    %v646 = vpop.f32.mrb[0].mxu0
    %v647 = vadd.f32 0.0, %v646
    %v648 = vpop.f32.mrb[0].mxu0
    %649 = vdwg.mxu0
    %650 = vrot.lane.b32.xlu0 %v60, 32
    %v651 = vpop.permute.xlu0 %650
    %v654 = vsel %vm323, %v647, 0
    %656 = vmatprep.subr.mxu0 0.0
    %657 = vmatpush1.msra.mxu0 %v651
    %658 = vmatprep.subr.mxu0 0.0
    %659 = vmatpush1.msra.mxu0 0.0
    %660 = vmatprep.subr.mxu0 0.0
    %661 = vmatpush1.msra.mxu0 0.0
    %662 = vmatprep.subr.mxu0 0.0
    %663 = vmatpush1.msra.mxu0 0.0
    %664 = vmatprep.subr.mxu0 0.0
    %665 = vmatpush1.msra.mxu0 0.0
    %666 = vmatprep.subr.mxu0 0.0
    %667 = vmatpush1.msra.mxu0 0.0
    %668 = vmatprep.subr.mxu0 0.0
    %669 = vmatpush1.msra.mxu0 0.0
    %670 = vmatprep.subr.mxu0 0.0
    %671 = vmatpush1.msra.mxu0 0.0
    %672 = vmatprep.subr.mxu0 0.0
    %673 = vmatpush1.msra.mxu0 0.0
    %674 = vmatprep.subr.mxu0 0.0
    %675 = vmatpush1.msra.mxu0 0.0
    %676 = vmatprep.subr.mxu0 0.0
    %677 = vmatpush1.msra.mxu0 0.0
    %678 = vmatprep.subr.mxu0 0.0
    %679 = vmatpush1.msra.mxu0 0.0
    %680 = vmatprep.subr.mxu0 0.0
    %681 = vmatpush1.msra.mxu0 0.0
    %682 = vmatprep.subr.mxu0 0.0
    %683 = vmatpush1.msra.mxu0 0.0
    %684 = vmatprep.subr.mxu0 0.0
    %685 = vmatpush1.msra.mxu0 0.0
    %686 = vmatprep.subr.mxu0 0.0
    %687 = vmatpush1.msra.mxu0 0.0
    %688 = vmatprep.subr.mxu0 0.0
    %689 = vmatpush1.msra.mxu0 0.0
    %690 = vmatprep.subr.mxu0 0.0
    %691 = vmatpush1.msra.mxu0 0.0
    %692 = vmatprep.subr.mxu0 0.0
    %693 = vmatpush1.msra.mxu0 0.0
    %694 = vmatprep.subr.mxu0 0.0
    %695 = vmatpush1.msra.mxu0 0.0
    %696 = vmatprep.subr.mxu0 0.0
    %697 = vmatpush1.msra.mxu0 0.0
    %698 = vmatprep.subr.mxu0 0.0
    %699 = vmatpush1.msra.mxu0 0.0
    %700 = vmatprep.subr.mxu0 0.0
    %701 = vmatpush1.msra.mxu0 0.0
    %702 = vmatprep.subr.mxu0 0.0
    %703 = vmatpush1.msra.mxu0 0.0
    %704 = vmatprep.subr.mxu0 0.0
    %705 = vmatpush1.msra.mxu0 0.0
    %706 = vmatprep.subr.mxu0 0.0
    %707 = vmatpush1.msra.mxu0 0.0
    %708 = vmatprep.subr.mxu0 0.0
    %709 = vmatpush1.msra.mxu0 0.0
    %710 = vmatprep.subr.mxu0 0.0
    %711 = vmatpush1.msra.mxu0 0.0
    %712 = vmatprep.subr.mxu0 0.0
    %713 = vmatpush1.msra.mxu0 0.0
    %714 = vmatprep.subr.mxu0 0.0
    %715 = vmatpush1.msra.mxu0 0.0
    %716 = vmatprep.subr.mxu0 0.0
    %717 = vmatpush1.msra.mxu0 0.0
    %718 = vmatprep.subr.mxu0 0.0
    %719 = vmatpush1.msra.mxu0 0.0
    %720 = vmatprep.mubr.f32.mxu0 0.0
    %721 = vmatmul.mubr.f32.gmra.mrb[0].mxu0 %v654
    %v722 = vpop.f32.mrb[0].mxu0
    %v723 = vadd.f32 0.0, %v722
    %v724 = vpop.f32.mrb[0].mxu0
    %725 = vdwg.mxu0
    %726 = vrot.lane.b32.xlu0 %v59, 32
    %v727 = vpop.permute.xlu0 %726
    %v730 = vsel %vm323, %v481, 0
    %732 = vmatprep.subr.mxu0 0.0
    %733 = vmatpush1.msra.mxu0 %v727
    %734 = vmatprep.subr.mxu0 0.0
    %735 = vmatpush1.msra.mxu0 0.0
    %736 = vmatprep.subr.mxu0 0.0
    %737 = vmatpush1.msra.mxu0 0.0
    %738 = vmatprep.subr.mxu0 0.0
    %739 = vmatpush1.msra.mxu0 0.0
    %740 = vmatprep.subr.mxu0 0.0
    %741 = vmatpush1.msra.mxu0 0.0
    %742 = vmatprep.subr.mxu0 0.0
    %743 = vmatpush1.msra.mxu0 0.0
    %744 = vmatprep.subr.mxu0 0.0
    %745 = vmatpush1.msra.mxu0 0.0
    %746 = vmatprep.subr.mxu0 0.0
    %747 = vmatpush1.msra.mxu0 0.0
    %748 = vmatprep.subr.mxu0 0.0
    %749 = vmatpush1.msra.mxu0 0.0
    %750 = vmatprep.subr.mxu0 0.0
    %751 = vmatpush1.msra.mxu0 0.0
    %752 = vmatprep.subr.mxu0 0.0
    %753 = vmatpush1.msra.mxu0 0.0
    %754 = vmatprep.subr.mxu0 0.0
    %755 = vmatpush1.msra.mxu0 0.0
    %756 = vmatprep.subr.mxu0 0.0
    %757 = vmatpush1.msra.mxu0 0.0
    %758 = vmatprep.subr.mxu0 0.0
    %759 = vmatpush1.msra.mxu0 0.0
    %760 = vmatprep.subr.mxu0 0.0
    %761 = vmatpush1.msra.mxu0 0.0
    %762 = vmatprep.subr.mxu0 0.0
    %763 = vmatpush1.msra.mxu0 0.0
    %764 = vmatprep.subr.mxu0 0.0
    %765 = vmatpush1.msra.mxu0 0.0
    %766 = vmatprep.subr.mxu0 0.0
    %767 = vmatpush1.msra.mxu0 0.0
    %768 = vmatprep.subr.mxu0 0.0
    %769 = vmatpush1.msra.mxu0 0.0
    %770 = vmatprep.subr.mxu0 0.0
    %771 = vmatpush1.msra.mxu0 0.0
    %772 = vmatprep.subr.mxu0 0.0
    %773 = vmatpush1.msra.mxu0 0.0
    %774 = vmatprep.subr.mxu0 0.0
    %775 = vmatpush1.msra.mxu0 0.0
    %776 = vmatprep.subr.mxu0 0.0
    %777 = vmatpush1.msra.mxu0 0.0
    %778 = vmatprep.subr.mxu0 0.0
    %779 = vmatpush1.msra.mxu0 0.0
    %780 = vmatprep.subr.mxu0 0.0
    %781 = vmatpush1.msra.mxu0 0.0
    %782 = vmatprep.subr.mxu0 0.0
    %783 = vmatpush1.msra.mxu0 0.0
    %784 = vmatprep.subr.mxu0 0.0
    %785 = vmatpush1.msra.mxu0 0.0
    %786 = vmatprep.subr.mxu0 0.0
    %787 = vmatpush1.msra.mxu0 0.0
    %788 = vmatprep.subr.mxu0 0.0
    %789 = vmatpush1.msra.mxu0 0.0
    %790 = vmatprep.subr.mxu0 0.0
    %791 = vmatpush1.msra.mxu0 0.0
    %792 = vmatprep.subr.mxu0 0.0
    %793 = vmatpush1.msra.mxu0 0.0
    %794 = vmatprep.subr.mxu0 0.0
    %795 = vmatpush1.msra.mxu0 0.0
    %796 = vmatprep.mubr.f32.mxu0 0.0
    %797 = vmatmul.mubr.f32.gmra.mrb[0].mxu0 %v730
    %v798 = vpop.f32.mrb[0].mxu0
    %v799 = vadd.f32 %v723, %v798
    %v800 = vpop.f32.mrb[0].mxu0
    %801 = vdwg.mxu0
    %802 = vrot.lane.b32.xlu0 %v141, 112
    %v803 = vpop.permute.xlu0 %802
    %804 = vrot.lane.b32.xlu0 %v231, 112
    %v805 = vpop.permute.xlu0 %804
    %v806 = vsel %vm323, %v803, 0
    %v808 = vsel %vm323, %v805, 0
    %810 = vmatprep.subr.mxu0 0.0
    %811 = vmatpush1.xpose.msra.mxu0 %v808
    %812 = vmatprep.subr.mxu0 0.0
    %813 = vmatpush1.xpose.msra.mxu0 0.0
    %814 = vmatprep.subr.mxu0 0.0
    %815 = vmatpush1.xpose.msra.mxu0 0.0
    %816 = vmatprep.subr.mxu0 0.0
    %817 = vmatpush1.xpose.msra.mxu0 0.0
    %818 = vmatprep.subr.mxu0 0.0
    %819 = vmatpush1.xpose.msra.mxu0 0.0
    %820 = vmatprep.subr.mxu0 0.0
    %821 = vmatpush1.xpose.msra.mxu0 0.0
    %822 = vmatprep.subr.mxu0 0.0
    %823 = vmatpush1.xpose.msra.mxu0 0.0
    %824 = vmatprep.subr.mxu0 0.0
    %825 = vmatpush1.xpose.msra.mxu0 0.0
    %826 = vmatprep.subr.mxu0 0.0
    %827 = vmatpush1.xpose.msra.mxu0 0.0
    %828 = vmatprep.subr.mxu0 0.0
    %829 = vmatpush1.xpose.msra.mxu0 0.0
    %830 = vmatprep.subr.mxu0 0.0
    %831 = vmatpush1.xpose.msra.mxu0 0.0
    %832 = vmatprep.subr.mxu0 0.0
    %833 = vmatpush1.xpose.msra.mxu0 0.0
    %834 = vmatprep.subr.mxu0 0.0
    %835 = vmatpush1.xpose.msra.mxu0 0.0
    %836 = vmatprep.subr.mxu0 0.0
    %837 = vmatpush1.xpose.msra.mxu0 0.0
    %838 = vmatprep.subr.mxu0 0.0
    %839 = vmatpush1.xpose.msra.mxu0 0.0
    %840 = vmatprep.subr.mxu0 0.0
    %841 = vmatpush1.xpose.msra.mxu0 0.0
    %842 = vmatprep.subr.mxu0 0.0
    %843 = vmatpush1.xpose.msra.mxu0 0.0
    %844 = vmatprep.subr.mxu0 0.0
    %845 = vmatpush1.xpose.msra.mxu0 0.0
    %846 = vmatprep.subr.mxu0 0.0
    %847 = vmatpush1.xpose.msra.mxu0 0.0
    %848 = vmatprep.subr.mxu0 0.0
    %849 = vmatpush1.xpose.msra.mxu0 0.0
    %850 = vmatprep.subr.mxu0 0.0
    %851 = vmatpush1.xpose.msra.mxu0 0.0
    %852 = vmatprep.subr.mxu0 0.0
    %853 = vmatpush1.xpose.msra.mxu0 0.0
    %854 = vmatprep.subr.mxu0 0.0
    %855 = vmatpush1.xpose.msra.mxu0 0.0
    %856 = vmatprep.subr.mxu0 0.0
    %857 = vmatpush1.xpose.msra.mxu0 0.0
    %858 = vmatprep.subr.mxu0 0.0
    %859 = vmatpush1.xpose.msra.mxu0 0.0
    %860 = vmatprep.subr.mxu0 0.0
    %861 = vmatpush1.xpose.msra.mxu0 0.0
    %862 = vmatprep.subr.mxu0 0.0
    %863 = vmatpush1.xpose.msra.mxu0 0.0
    %864 = vmatprep.subr.mxu0 0.0
    %865 = vmatpush1.xpose.msra.mxu0 0.0
    %866 = vmatprep.subr.mxu0 0.0
    %867 = vmatpush1.xpose.msra.mxu0 0.0
    %868 = vmatprep.subr.mxu0 0.0
    %869 = vmatpush1.xpose.msra.mxu0 0.0
    %870 = vmatprep.subr.mxu0 0.0
    %871 = vmatpush1.xpose.msra.mxu0 0.0
    %872 = vmatprep.subr.mxu0 0.0
    %873 = vmatpush1.xpose.msra.mxu0 0.0
    %874 = vmatprep.mubr.f32.mxu0 0.0
    %875 = vmatmul.mubr.f32.gmra.mrb[0].mxu0 %v806
    %v876 = vpop.f32.mrb[0].mxu0
    %v877 = vadd.f32 0.0, %v876
    %v878 = vpop.f32.mrb[0].mxu0
    %879 = vdwg.mxu0
    %v880 = vsel %vm323, %v877, -inf
    %881 = vmax.xlane.f32.xlu0 %v880
    %v882 = vpop.xlane.xlu0 %881
    %v883 = vsub.f32 %v877, %v882
    %v884 = vmul.f32 %v883, 1.442695
    %v885 = vpow.pop %v884
    %v886 = vsel %vm323, %v885, 0.0
    %887 = vadd.xlane.f32.xlu0 %v886
    %v888 = vpop.xlane.xlu0 %887
    %v889 = vrcp.pop %v888
    %v890 = vmul.f32 %v885, %v889
    %891 = vrot.lane.b32.xlu0 %v320, 112
    %v892 = vpop.permute.xlu0 %891
    %v895 = vsel %vm323, %v890, 0
    %897 = vmatprep.subr.mxu0 0.0
    %898 = vmatpush1.msra.mxu0 %v892
    %899 = vmatprep.subr.mxu0 0.0
    %900 = vmatpush1.msra.mxu0 0.0
    %901 = vmatprep.subr.mxu0 0.0
    %902 = vmatpush1.msra.mxu0 0.0
    %903 = vmatprep.subr.mxu0 0.0
    %904 = vmatpush1.msra.mxu0 0.0
    %905 = vmatprep.subr.mxu0 0.0
    %906 = vmatpush1.msra.mxu0 0.0
    %907 = vmatprep.subr.mxu0 0.0
    %908 = vmatpush1.msra.mxu0 0.0
    %909 = vmatprep.subr.mxu0 0.0
    %910 = vmatpush1.msra.mxu0 0.0
    %911 = vmatprep.subr.mxu0 0.0
    %912 = vmatpush1.msra.mxu0 0.0
    %913 = vmatprep.subr.mxu0 0.0
    %914 = vmatpush1.msra.mxu0 0.0
    %915 = vmatprep.subr.mxu0 0.0
    %916 = vmatpush1.msra.mxu0 0.0
    %917 = vmatprep.subr.mxu0 0.0
    %918 = vmatpush1.msra.mxu0 0.0
    %919 = vmatprep.subr.mxu0 0.0
    %920 = vmatpush1.msra.mxu0 0.0
    %921 = vmatprep.subr.mxu0 0.0
    %922 = vmatpush1.msra.mxu0 0.0
    %923 = vmatprep.subr.mxu0 0.0
    %924 = vmatpush1.msra.mxu0 0.0
    %925 = vmatprep.subr.mxu0 0.0
    %926 = vmatpush1.msra.mxu0 0.0
    %927 = vmatprep.subr.mxu0 0.0
    %928 = vmatpush1.msra.mxu0 0.0
    %929 = vmatprep.subr.mxu0 0.0
    %930 = vmatpush1.msra.mxu0 0.0
    %931 = vmatprep.subr.mxu0 0.0
    %932 = vmatpush1.msra.mxu0 0.0
    %933 = vmatprep.subr.mxu0 0.0
    %934 = vmatpush1.msra.mxu0 0.0
    %935 = vmatprep.subr.mxu0 0.0
    %936 = vmatpush1.msra.mxu0 0.0
    %937 = vmatprep.subr.mxu0 0.0
    %938 = vmatpush1.msra.mxu0 0.0
    %939 = vmatprep.subr.mxu0 0.0
    %940 = vmatpush1.msra.mxu0 0.0
    %941 = vmatprep.subr.mxu0 0.0
    %942 = vmatpush1.msra.mxu0 0.0
    %943 = vmatprep.subr.mxu0 0.0
    %944 = vmatpush1.msra.mxu0 0.0
    %945 = vmatprep.subr.mxu0 0.0
    %946 = vmatpush1.msra.mxu0 0.0
    %947 = vmatprep.subr.mxu0 0.0
    %948 = vmatpush1.msra.mxu0 0.0
    %949 = vmatprep.subr.mxu0 0.0
    %950 = vmatpush1.msra.mxu0 0.0
    %951 = vmatprep.subr.mxu0 0.0
    %952 = vmatpush1.msra.mxu0 0.0
    %953 = vmatprep.subr.mxu0 0.0
    %954 = vmatpush1.msra.mxu0 0.0
    %955 = vmatprep.subr.mxu0 0.0
    %956 = vmatpush1.msra.mxu0 0.0
    %957 = vmatprep.subr.mxu0 0.0
    %958 = vmatpush1.msra.mxu0 0.0
    %959 = vmatprep.subr.mxu0 0.0
    %960 = vmatpush1.msra.mxu0 0.0
    %961 = vmatprep.mubr.f32.mxu0 0.0
    %962 = vmatmul.mubr.f32.gmra.mrb[0].mxu0 %v895
    %v963 = vpop.f32.mrb[0].mxu0
    %v964 = vadd.f32 0.0, %v963
    %v965 = vpop.f32.mrb[0].mxu0
    %966 = vdwg.mxu0
    %967 = vrot.lane.b32.xlu0 %v61, 32
    %v968 = vpop.permute.xlu0 %967
    %v971 = vsel %vm323, %v964, 0
    %973 = vmatprep.subr.mxu0 0.0
    %974 = vmatpush1.msra.mxu0 %v968
    %975 = vmatprep.subr.mxu0 0.0
    %976 = vmatpush1.msra.mxu0 0.0
    %977 = vmatprep.subr.mxu0 0.0
    %978 = vmatpush1.msra.mxu0 0.0
    %979 = vmatprep.subr.mxu0 0.0
    %980 = vmatpush1.msra.mxu0 0.0
    %981 = vmatprep.subr.mxu0 0.0
    %982 = vmatpush1.msra.mxu0 0.0
    %983 = vmatprep.subr.mxu0 0.0
    %984 = vmatpush1.msra.mxu0 0.0
    %985 = vmatprep.subr.mxu0 0.0
    %986 = vmatpush1.msra.mxu0 0.0
    %987 = vmatprep.subr.mxu0 0.0
    %988 = vmatpush1.msra.mxu0 0.0
    %989 = vmatprep.subr.mxu0 0.0
    %990 = vmatpush1.msra.mxu0 0.0
    %991 = vmatprep.subr.mxu0 0.0
    %992 = vmatpush1.msra.mxu0 0.0
    %993 = vmatprep.subr.mxu0 0.0
    %994 = vmatpush1.msra.mxu0 0.0
    %995 = vmatprep.subr.mxu0 0.0
    %996 = vmatpush1.msra.mxu0 0.0
    %997 = vmatprep.subr.mxu0 0.0
    %998 = vmatpush1.msra.mxu0 0.0
    %999 = vmatprep.subr.mxu0 0.0
    %1000 = vmatpush1.msra.mxu0 0.0
    %1001 = vmatprep.subr.mxu0 0.0
    %1002 = vmatpush1.msra.mxu0 0.0
    %1003 = vmatprep.subr.mxu0 0.0
    %1004 = vmatpush1.msra.mxu0 0.0
    %1005 = vmatprep.subr.mxu0 0.0
    %1006 = vmatpush1.msra.mxu0 0.0
    %1007 = vmatprep.subr.mxu0 0.0
    %1008 = vmatpush1.msra.mxu0 0.0
    %1009 = vmatprep.subr.mxu0 0.0
    %1010 = vmatpush1.msra.mxu0 0.0
    %1011 = vmatprep.subr.mxu0 0.0
    %1012 = vmatpush1.msra.mxu0 0.0
    %1013 = vmatprep.subr.mxu0 0.0
    %1014 = vmatpush1.msra.mxu0 0.0
    %1015 = vmatprep.subr.mxu0 0.0
    %1016 = vmatpush1.msra.mxu0 0.0
    %1017 = vmatprep.subr.mxu0 0.0
    %1018 = vmatpush1.msra.mxu0 0.0
    %1019 = vmatprep.subr.mxu0 0.0
    %1020 = vmatpush1.msra.mxu0 0.0
    %1021 = vmatprep.subr.mxu0 0.0
    %1022 = vmatpush1.msra.mxu0 0.0
    %1023 = vmatprep.subr.mxu0 0.0
    %1024 = vmatpush1.msra.mxu0 0.0
    %1025 = vmatprep.subr.mxu0 0.0
    %1026 = vmatpush1.msra.mxu0 0.0
    %1027 = vmatprep.subr.mxu0 0.0
    %1028 = vmatpush1.msra.mxu0 0.0
    %1029 = vmatprep.subr.mxu0 0.0
    %1030 = vmatpush1.msra.mxu0 0.0
    %1031 = vmatprep.subr.mxu0 0.0
    %1032 = vmatpush1.msra.mxu0 0.0
    %1033 = vmatprep.subr.mxu0 0.0
    %1034 = vmatpush1.msra.mxu0 0.0
    %1035 = vmatprep.subr.mxu0 0.0
    %1036 = vmatpush1.msra.mxu0 0.0
    %1037 = vmatprep.mubr.f32.mxu0 0.0
    %1038 = vmatmul.mubr.f32.gmra.mrb[0].mxu0 %v971
    %v1039 = vpop.f32.mrb[0].mxu0
    %v1040 = vadd.f32 0.0, %v1039
    %v1041 = vpop.f32.mrb[0].mxu0
    %1042 = vdwg.mxu0
    %v1043 = vadd.f32 %v799, %v1040
    %1044 = vrot.lane.b32.xlu0 %v141, 104
    %v1045 = vpop.permute.xlu0 %1044
    %1046 = vrot.lane.b32.xlu0 %v231, 104
    %v1047 = vpop.permute.xlu0 %1046
    %v1048 = vsel %vm323, %v1045, 0
    %v1050 = vsel %vm323, %v1047, 0
    %1052 = vmatprep.subr.mxu0 0.0
    %1053 = vmatpush1.xpose.msra.mxu0 %v1050
    %1054 = vmatprep.subr.mxu0 0.0
    %1055 = vmatpush1.xpose.msra.mxu0 0.0
    %1056 = vmatprep.subr.mxu0 0.0
    %1057 = vmatpush1.xpose.msra.mxu0 0.0
    %1058 = vmatprep.subr.mxu0 0.0
    %1059 = vmatpush1.xpose.msra.mxu0 0.0
    %1060 = vmatprep.subr.mxu0 0.0
    %1061 = vmatpush1.xpose.msra.mxu0 0.0
    %1062 = vmatprep.subr.mxu0 0.0
    %1063 = vmatpush1.xpose.msra.mxu0 0.0
    %1064 = vmatprep.subr.mxu0 0.0
    %1065 = vmatpush1.xpose.msra.mxu0 0.0
    %1066 = vmatprep.subr.mxu0 0.0
    %1067 = vmatpush1.xpose.msra.mxu0 0.0
    %1068 = vmatprep.subr.mxu0 0.0
    %1069 = vmatpush1.xpose.msra.mxu0 0.0
    %1070 = vmatprep.subr.mxu0 0.0
    %1071 = vmatpush1.xpose.msra.mxu0 0.0
    %1072 = vmatprep.subr.mxu0 0.0
    %1073 = vmatpush1.xpose.msra.mxu0 0.0
    %1074 = vmatprep.subr.mxu0 0.0
    %1075 = vmatpush1.xpose.msra.mxu0 0.0
    %1076 = vmatprep.subr.mxu0 0.0
    %1077 = vmatpush1.xpose.msra.mxu0 0.0
    %1078 = vmatprep.subr.mxu0 0.0
    %1079 = vmatpush1.xpose.msra.mxu0 0.0
    %1080 = vmatprep.subr.mxu0 0.0
    %1081 = vmatpush1.xpose.msra.mxu0 0.0
    %1082 = vmatprep.subr.mxu0 0.0
    %1083 = vmatpush1.xpose.msra.mxu0 0.0
    %1084 = vmatprep.subr.mxu0 0.0
    %1085 = vmatpush1.xpose.msra.mxu0 0.0
    %1086 = vmatprep.subr.mxu0 0.0
    %1087 = vmatpush1.xpose.msra.mxu0 0.0
    %1088 = vmatprep.subr.mxu0 0.0
    %1089 = vmatpush1.xpose.msra.mxu0 0.0
    %1090 = vmatprep.subr.mxu0 0.0
    %1091 = vmatpush1.xpose.msra.mxu0 0.0
    %1092 = vmatprep.subr.mxu0 0.0
    %1093 = vmatpush1.xpose.msra.mxu0 0.0
    %1094 = vmatprep.subr.mxu0 0.0
    %1095 = vmatpush1.xpose.msra.mxu0 0.0
    %1096 = vmatprep.subr.mxu0 0.0
    %1097 = vmatpush1.xpose.msra.mxu0 0.0
    %1098 = vmatprep.subr.mxu0 0.0
    %1099 = vmatpush1.xpose.msra.mxu0 0.0
    %1100 = vmatprep.subr.mxu0 0.0
    %1101 = vmatpush1.xpose.msra.mxu0 0.0
    %1102 = vmatprep.subr.mxu0 0.0
    %1103 = vmatpush1.xpose.msra.mxu0 0.0
    %1104 = vmatprep.subr.mxu0 0.0
    %1105 = vmatpush1.xpose.msra.mxu0 0.0
    %1106 = vmatprep.subr.mxu0 0.0
    %1107 = vmatpush1.xpose.msra.mxu0 0.0
    %1108 = vmatprep.subr.mxu0 0.0
    %1109 = vmatpush1.xpose.msra.mxu0 0.0
    %1110 = vmatprep.subr.mxu0 0.0
    %1111 = vmatpush1.xpose.msra.mxu0 0.0
    %1112 = vmatprep.subr.mxu0 0.0
    %1113 = vmatpush1.xpose.msra.mxu0 0.0
    %1114 = vmatprep.subr.mxu0 0.0
    %1115 = vmatpush1.xpose.msra.mxu0 0.0
    %1116 = vmatprep.mubr.f32.mxu0 0.0
    %1117 = vmatmul.mubr.f32.gmra.mrb[0].mxu0 %v1048
    %v1118 = vpop.f32.mrb[0].mxu0
    %v1119 = vadd.f32 0.0, %v1118
    %v1120 = vpop.f32.mrb[0].mxu0
    %1121 = vdwg.mxu0
    %v1122 = vsel %vm323, %v1119, -inf
    %1123 = vmax.xlane.f32.xlu0 %v1122
    %v1124 = vpop.xlane.xlu0 %1123
    %v1125 = vsub.f32 %v1119, %v1124
    %v1126 = vmul.f32 %v1125, 1.442695
    %v1127 = vpow.pop %v1126
    %v1128 = vsel %vm323, %v1127, 0.0
    %1129 = vadd.xlane.f32.xlu0 %v1128
    %v1130 = vpop.xlane.xlu0 %1129
    %v1131 = vrcp.pop %v1130
    %v1132 = vmul.f32 %v1127, %v1131
    %1133 = vrot.lane.b32.xlu0 %v320, 104
    %v1134 = vpop.permute.xlu0 %1133
    %v1137 = vsel %vm323, %v1132, 0
    %1139 = vmatprep.subr.mxu0 0.0
    %1140 = vmatpush1.msra.mxu0 %v1134
    %1141 = vmatprep.subr.mxu0 0.0
    %1142 = vmatpush1.msra.mxu0 0.0
    %1143 = vmatprep.subr.mxu0 0.0
    %1144 = vmatpush1.msra.mxu0 0.0
    %1145 = vmatprep.subr.mxu0 0.0
    %1146 = vmatpush1.msra.mxu0 0.0
    %1147 = vmatprep.subr.mxu0 0.0
    %1148 = vmatpush1.msra.mxu0 0.0
    %1149 = vmatprep.subr.mxu0 0.0
    %1150 = vmatpush1.msra.mxu0 0.0
    %1151 = vmatprep.subr.mxu0 0.0
    %1152 = vmatpush1.msra.mxu0 0.0
    %1153 = vmatprep.subr.mxu0 0.0
    %1154 = vmatpush1.msra.mxu0 0.0
    %1155 = vmatprep.subr.mxu0 0.0
    %1156 = vmatpush1.msra.mxu0 0.0
    %1157 = vmatprep.subr.mxu0 0.0
    %1158 = vmatpush1.msra.mxu0 0.0
    %1159 = vmatprep.subr.mxu0 0.0
    %1160 = vmatpush1.msra.mxu0 0.0
    %1161 = vmatprep.subr.mxu0 0.0
    %1162 = vmatpush1.msra.mxu0 0.0
    %1163 = vmatprep.subr.mxu0 0.0
    %1164 = vmatpush1.msra.mxu0 0.0
    %1165 = vmatprep.subr.mxu0 0.0
    %1166 = vmatpush1.msra.mxu0 0.0
    %1167 = vmatprep.subr.mxu0 0.0
    %1168 = vmatpush1.msra.mxu0 0.0
    %1169 = vmatprep.subr.mxu0 0.0
    %1170 = vmatpush1.msra.mxu0 0.0
    %1171 = vmatprep.subr.mxu0 0.0
    %1172 = vmatpush1.msra.mxu0 0.0
    %1173 = vmatprep.subr.mxu0 0.0
    %1174 = vmatpush1.msra.mxu0 0.0
    %1175 = vmatprep.subr.mxu0 0.0
    %1176 = vmatpush1.msra.mxu0 0.0
    %1177 = vmatprep.subr.mxu0 0.0
    %1178 = vmatpush1.msra.mxu0 0.0
    %1179 = vmatprep.subr.mxu0 0.0
    %1180 = vmatpush1.msra.mxu0 0.0
    %1181 = vmatprep.subr.mxu0 0.0
    %1182 = vmatpush1.msra.mxu0 0.0
    %1183 = vmatprep.subr.mxu0 0.0
    %1184 = vmatpush1.msra.mxu0 0.0
    %1185 = vmatprep.subr.mxu0 0.0
    %1186 = vmatpush1.msra.mxu0 0.0
    %1187 = vmatprep.subr.mxu0 0.0
    %1188 = vmatpush1.msra.mxu0 0.0
    %1189 = vmatprep.subr.mxu0 0.0
    %1190 = vmatpush1.msra.mxu0 0.0
    %1191 = vmatprep.subr.mxu0 0.0
    %1192 = vmatpush1.msra.mxu0 0.0
    %1193 = vmatprep.subr.mxu0 0.0
    %1194 = vmatpush1.msra.mxu0 0.0
    %1195 = vmatprep.subr.mxu0 0.0
    %1196 = vmatpush1.msra.mxu0 0.0
    %1197 = vmatprep.subr.mxu0 0.0
    %1198 = vmatpush1.msra.mxu0 0.0
    %1199 = vmatprep.subr.mxu0 0.0
    %1200 = vmatpush1.msra.mxu0 0.0
    %1201 = vmatprep.subr.mxu0 0.0
    %1202 = vmatpush1.msra.mxu0 0.0
    %1203 = vmatprep.mubr.f32.mxu0 0.0
    %1204 = vmatmul.mubr.f32.gmra.mrb[0].mxu0 %v1137
    %v1205 = vpop.f32.mrb[0].mxu0
    %v1206 = vadd.f32 0.0, %v1205
    %v1207 = vpop.f32.mrb[0].mxu0
    %1208 = vdwg.mxu0
    %1209 = vrot.lane.b32.xlu0 %v62, 32
    %v1210 = vpop.permute.xlu0 %1209
    %v1213 = vsel %vm323, %v1206, 0
    %1215 = vmatprep.subr.mxu0 0.0
    %1216 = vmatpush1.msra.mxu0 %v1210
    %1217 = vmatprep.subr.mxu0 0.0
    %1218 = vmatpush1.msra.mxu0 0.0
    %1219 = vmatprep.subr.mxu0 0.0
    %1220 = vmatpush1.msra.mxu0 0.0
    %1221 = vmatprep.subr.mxu0 0.0
    %1222 = vmatpush1.msra.mxu0 0.0
    %1223 = vmatprep.subr.mxu0 0.0
    %1224 = vmatpush1.msra.mxu0 0.0
    %1225 = vmatprep.subr.mxu0 0.0
    %1226 = vmatpush1.msra.mxu0 0.0
    %1227 = vmatprep.subr.mxu0 0.0
    %1228 = vmatpush1.msra.mxu0 0.0
    %1229 = vmatprep.subr.mxu0 0.0
    %1230 = vmatpush1.msra.mxu0 0.0
    %1231 = vmatprep.subr.mxu0 0.0
    %1232 = vmatpush1.msra.mxu0 0.0
    %1233 = vmatprep.subr.mxu0 0.0
    %1234 = vmatpush1.msra.mxu0 0.0
    %1235 = vmatprep.subr.mxu0 0.0
    %1236 = vmatpush1.msra.mxu0 0.0
    %1237 = vmatprep.subr.mxu0 0.0
    %1238 = vmatpush1.msra.mxu0 0.0
    %1239 = vmatprep.subr.mxu0 0.0
    %1240 = vmatpush1.msra.mxu0 0.0
    %1241 = vmatprep.subr.mxu0 0.0
    %1242 = vmatpush1.msra.mxu0 0.0
    %1243 = vmatprep.subr.mxu0 0.0
    %1244 = vmatpush1.msra.mxu0 0.0
    %1245 = vmatprep.subr.mxu0 0.0
    %1246 = vmatpush1.msra.mxu0 0.0
    %1247 = vmatprep.subr.mxu0 0.0
    %1248 = vmatpush1.msra.mxu0 0.0
    %1249 = vmatprep.subr.mxu0 0.0
    %1250 = vmatpush1.msra.mxu0 0.0
    %1251 = vmatprep.subr.mxu0 0.0
    %1252 = vmatpush1.msra.mxu0 0.0
    %1253 = vmatprep.subr.mxu0 0.0
    %1254 = vmatpush1.msra.mxu0 0.0
    %1255 = vmatprep.subr.mxu0 0.0
    %1256 = vmatpush1.msra.mxu0 0.0
    %1257 = vmatprep.subr.mxu0 0.0
    %1258 = vmatpush1.msra.mxu0 0.0
    %1259 = vmatprep.subr.mxu0 0.0
    %1260 = vmatpush1.msra.mxu0 0.0
    %1261 = vmatprep.subr.mxu0 0.0
    %1262 = vmatpush1.msra.mxu0 0.0
    %1263 = vmatprep.subr.mxu0 0.0
    %1264 = vmatpush1.msra.mxu0 0.0
    %1265 = vmatprep.subr.mxu0 0.0
    %1266 = vmatpush1.msra.mxu0 0.0
    %1267 = vmatprep.subr.mxu0 0.0
    %1268 = vmatpush1.msra.mxu0 0.0
    %1269 = vmatprep.subr.mxu0 0.0
    %1270 = vmatpush1.msra.mxu0 0.0
    %1271 = vmatprep.subr.mxu0 0.0
    %1272 = vmatpush1.msra.mxu0 0.0
    %1273 = vmatprep.subr.mxu0 0.0
    %1274 = vmatpush1.msra.mxu0 0.0
    %1275 = vmatprep.subr.mxu0 0.0
    %1276 = vmatpush1.msra.mxu0 0.0
    %1277 = vmatprep.subr.mxu0 0.0
    %1278 = vmatpush1.msra.mxu0 0.0
    %1279 = vmatprep.mubr.f32.mxu0 0.0
    %1280 = vmatmul.mubr.f32.gmra.mrb[0].mxu0 %v1213
    %v1281 = vpop.f32.mrb[0].mxu0
    %v1282 = vadd.f32 0.0, %v1281
    %v1283 = vpop.f32.mrb[0].mxu0
    %1284 = vdwg.mxu0
    %v1285 = vadd.f32 %v1043, %v1282
    %v1286 = vlaneseq
    %v1287 = vshrl.u32 %v1286, 7
    %v1288 = vsub.s32 3, %v1287
    %v1289 = vrot.slane %v63, %v1288
    %v1290 = vadd.f32 %v1285, %v1289
    %v1291 = vadd.f32 %v65, %v1290
    %v1292 = vsel %vm70, %v1291, 0.0
    %1293 = vadd.xlane.f32.xlu0 %v1292
    %v1294 = vpop.xlane.xlu0 %1293
    %v1295 = vrcp.pop 32.0
    %v1296 = vmul.f32 %v1294, %v1295
    %v1297 = vsub.f32 %v1291, %v1296
    %v1298 = vmul.f32 %v1297, %v1297
    %v1299 = vsel %vm70, %v1298, 0.0
    %1300 = vadd.xlane.f32.xlu0 %v1299
    %v1301 = vpop.xlane.xlu0 %1300
    %v1302 = vmul.f32 %v1301, %v1295
    %v1303 = vadd.f32 %v1302, 1e-05
    %v1304 = vrsqrt.pop %v1303
    %v1305 = vmul.f32 %v1297, %v1304
    %v1306 = vlaneseq
    %v1307 = vshrl.u32 %v1306, 7
    %v1308 = vsub.s32 4, %v1307
    %v1309 = vrot.slane %v63, %v1308
    %v1310 = vmul.f32 %v1305, %v1309
    %v1311 = vlaneseq
    %v1312 = vshrl.u32 %v1311, 7
    %v1313 = vsub.s32 5, %v1312
    %v1314 = vrot.slane %v63, %v1313
    %v1315 = vadd.f32 %v1310, %v1314
    %1316 = vst.msk [vmem:[#allocation8] sm:$0xff] %vm70, %v1315
    %s1317 = scalar_lea.vmem [#allocation2], 8
    %v1318 = vld [vmem:[%s1317] sm:$0xff]
    %s1319 = scalar_lea.vmem [#allocation5], 8
    %v1320 = vld [vmem:[%s1319] sm:$0xff]
    %v1322 = vsel %vm70, %v1318, 0
    %1324 = vmatprep.subr.mxu0 0.0
    %1325 = vmatpush1.msra.mxu0 %v59
    %1326 = vmatprep.subr.mxu0 0.0
    %1327 = vmatpush1.msra.mxu0 %v60
    %1328 = vmatprep.subr.mxu0 0.0
    %1329 = vmatpush1.msra.mxu0 %v61
    %1330 = vmatprep.subr.mxu0 0.0
    %1331 = vmatpush1.msra.mxu0 %v62
    %1332 = vmatprep.subr.mxu0 0.0
    %1333 = vmatpush1.msra.mxu0 0.0
    %1334 = vmatprep.subr.mxu0 0.0
    %1335 = vmatpush1.msra.mxu0 0.0
    %1336 = vmatprep.subr.mxu0 0.0
    %1337 = vmatpush1.msra.mxu0 0.0
    %1338 = vmatprep.subr.mxu0 0.0
    %1339 = vmatpush1.msra.mxu0 0.0
    %1340 = vmatprep.subr.mxu0 0.0
    %1341 = vmatpush1.msra.mxu0 0.0
    %1342 = vmatprep.subr.mxu0 0.0
    %1343 = vmatpush1.msra.mxu0 0.0
    %1344 = vmatprep.subr.mxu0 0.0
    %1345 = vmatpush1.msra.mxu0 0.0
    %1346 = vmatprep.subr.mxu0 0.0
    %1347 = vmatpush1.msra.mxu0 0.0
    %1348 = vmatprep.subr.mxu0 0.0
    %1349 = vmatpush1.msra.mxu0 0.0
    %1350 = vmatprep.subr.mxu0 0.0
    %1351 = vmatpush1.msra.mxu0 0.0
    %1352 = vmatprep.subr.mxu0 0.0
    %1353 = vmatpush1.msra.mxu0 0.0
    %1354 = vmatprep.subr.mxu0 0.0
    %1355 = vmatpush1.msra.mxu0 0.0
    %1356 = vmatprep.subr.mxu0 0.0
    %1357 = vmatpush1.msra.mxu0 0.0
    %1358 = vmatprep.subr.mxu0 0.0
    %1359 = vmatpush1.msra.mxu0 0.0
    %1360 = vmatprep.subr.mxu0 0.0
    %1361 = vmatpush1.msra.mxu0 0.0
    %1362 = vmatprep.subr.mxu0 0.0
    %1363 = vmatpush1.msra.mxu0 0.0
    %1364 = vmatprep.subr.mxu0 0.0
    %1365 = vmatpush1.msra.mxu0 0.0
    %1366 = vmatprep.subr.mxu0 0.0
    %1367 = vmatpush1.msra.mxu0 0.0
    %1368 = vmatprep.subr.mxu0 0.0
    %1369 = vmatpush1.msra.mxu0 0.0
    %1370 = vmatprep.subr.mxu0 0.0
    %1371 = vmatpush1.msra.mxu0 0.0
    %1372 = vmatprep.subr.mxu0 0.0
    %1373 = vmatpush1.msra.mxu0 0.0
    %1374 = vmatprep.subr.mxu0 0.0
    %1375 = vmatpush1.msra.mxu0 0.0
    %1376 = vmatprep.subr.mxu0 0.0
    %1377 = vmatpush1.msra.mxu0 0.0
    %1378 = vmatprep.subr.mxu0 0.0
    %1379 = vmatpush1.msra.mxu0 0.0
    %1380 = vmatprep.subr.mxu0 0.0
    %1381 = vmatpush1.msra.mxu0 0.0
    %1382 = vmatprep.subr.mxu0 0.0
    %1383 = vmatpush1.msra.mxu0 0.0
    %1384 = vmatprep.subr.mxu0 0.0
    %1385 = vmatpush1.msra.mxu0 0.0
    %1386 = vmatprep.subr.mxu0 0.0
    %1387 = vmatpush1.msra.mxu0 0.0
    %1388 = vmatprep.mubr.f32.mxu0 0.0
    %1389 = vmatmul.mubr.f32.gmra.mrb[0].mxu0 %v1322
    %v1390 = vpop.f32.mrb[0].mxu0
    %v1391 = vadd.f32 %v69, %v1390
    %v1392 = vpop.f32.mrb[0].mxu0
    %1393 = vdwg.mxu0
    %1394 = vmatprep.subr.mxu0 0.0
    %1395 = vmatpush1.msra.mxu0 %v153
    %1396 = vmatprep.subr.mxu0 0.0
    %1397 = vmatpush1.msra.mxu0 %v155
    %1398 = vmatprep.subr.mxu0 0.0
    %1399 = vmatpush1.msra.mxu0 %v157
    %1400 = vmatprep.subr.mxu0 0.0
    %1401 = vmatpush1.msra.mxu0 %v159
    %1402 = vmatprep.subr.mxu0 0.0
    %1403 = vmatpush1.msra.mxu0 0.0
    %1404 = vmatprep.subr.mxu0 0.0
    %1405 = vmatpush1.msra.mxu0 0.0
    %1406 = vmatprep.subr.mxu0 0.0
    %1407 = vmatpush1.msra.mxu0 0.0
    %1408 = vmatprep.subr.mxu0 0.0
    %1409 = vmatpush1.msra.mxu0 0.0
    %1410 = vmatprep.subr.mxu0 0.0
    %1411 = vmatpush1.msra.mxu0 0.0
    %1412 = vmatprep.subr.mxu0 0.0
    %1413 = vmatpush1.msra.mxu0 0.0
    %1414 = vmatprep.subr.mxu0 0.0
    %1415 = vmatpush1.msra.mxu0 0.0
    %1416 = vmatprep.subr.mxu0 0.0
    %1417 = vmatpush1.msra.mxu0 0.0
    %1418 = vmatprep.subr.mxu0 0.0
    %1419 = vmatpush1.msra.mxu0 0.0
    %1420 = vmatprep.subr.mxu0 0.0
    %1421 = vmatpush1.msra.mxu0 0.0
    %1422 = vmatprep.subr.mxu0 0.0
    %1423 = vmatpush1.msra.mxu0 0.0
    %1424 = vmatprep.subr.mxu0 0.0
    %1425 = vmatpush1.msra.mxu0 0.0
    %1426 = vmatprep.subr.mxu0 0.0
    %1427 = vmatpush1.msra.mxu0 0.0
    %1428 = vmatprep.subr.mxu0 0.0
    %1429 = vmatpush1.msra.mxu0 0.0
    %1430 = vmatprep.subr.mxu0 0.0
    %1431 = vmatpush1.msra.mxu0 0.0
    %1432 = vmatprep.subr.mxu0 0.0
    %1433 = vmatpush1.msra.mxu0 0.0
    %1434 = vmatprep.subr.mxu0 0.0
    %1435 = vmatpush1.msra.mxu0 0.0
    %1436 = vmatprep.subr.mxu0 0.0
    %1437 = vmatpush1.msra.mxu0 0.0
    %1438 = vmatprep.subr.mxu0 0.0
    %1439 = vmatpush1.msra.mxu0 0.0
    %1440 = vmatprep.subr.mxu0 0.0
    %1441 = vmatpush1.msra.mxu0 0.0
    %1442 = vmatprep.subr.mxu0 0.0
    %1443 = vmatpush1.msra.mxu0 0.0
    %1444 = vmatprep.subr.mxu0 0.0
    %1445 = vmatpush1.msra.mxu0 0.0
    %1446 = vmatprep.subr.mxu0 0.0
    %1447 = vmatpush1.msra.mxu0 0.0
    %1448 = vmatprep.subr.mxu0 0.0
    %1449 = vmatpush1.msra.mxu0 0.0
    %1450 = vmatprep.subr.mxu0 0.0
    %1451 = vmatpush1.msra.mxu0 0.0
    %1452 = vmatprep.subr.mxu0 0.0
    %1453 = vmatpush1.msra.mxu0 0.0
    %1454 = vmatprep.subr.mxu0 0.0
    %1455 = vmatpush1.msra.mxu0 0.0
    %1456 = vmatprep.subr.mxu0 0.0
    %1457 = vmatpush1.msra.mxu0 0.0
    %1458 = vmatprep.mubr.f32.mxu0 0.0
    %1459 = vmatmul.mubr.f32.gmra.mrb[0].mxu0 %v1322
    %v1460 = vpop.f32.mrb[0].mxu0
    %v1461 = vadd.f32 %v147, %v1460
    %v1462 = vpop.f32.mrb[0].mxu0
    %1463 = vdwg.mxu0
    %v1465 = vsel %vm70, %v1320, 0
    %1467 = vmatprep.subr.mxu0 0.0
    %1468 = vmatpush1.msra.mxu0 %v239
    %1469 = vmatprep.subr.mxu0 0.0
    %1470 = vmatpush1.msra.mxu0 %v241
    %1471 = vmatprep.subr.mxu0 0.0
    %1472 = vmatpush1.msra.mxu0 %v243
    %1473 = vmatprep.subr.mxu0 0.0
    %1474 = vmatpush1.msra.mxu0 %v245
    %1475 = vmatprep.subr.mxu0 0.0
    %1476 = vmatpush1.msra.mxu0 0.0
    %1477 = vmatprep.subr.mxu0 0.0
    %1478 = vmatpush1.msra.mxu0 0.0
    %1479 = vmatprep.subr.mxu0 0.0
    %1480 = vmatpush1.msra.mxu0 0.0
    %1481 = vmatprep.subr.mxu0 0.0
    %1482 = vmatpush1.msra.mxu0 0.0
    %1483 = vmatprep.subr.mxu0 0.0
    %1484 = vmatpush1.msra.mxu0 0.0
    %1485 = vmatprep.subr.mxu0 0.0
    %1486 = vmatpush1.msra.mxu0 0.0
    %1487 = vmatprep.subr.mxu0 0.0
    %1488 = vmatpush1.msra.mxu0 0.0
    %1489 = vmatprep.subr.mxu0 0.0
    %1490 = vmatpush1.msra.mxu0 0.0
    %1491 = vmatprep.subr.mxu0 0.0
    %1492 = vmatpush1.msra.mxu0 0.0
    %1493 = vmatprep.subr.mxu0 0.0
    %1494 = vmatpush1.msra.mxu0 0.0
    %1495 = vmatprep.subr.mxu0 0.0
    %1496 = vmatpush1.msra.mxu0 0.0
    %1497 = vmatprep.subr.mxu0 0.0
    %1498 = vmatpush1.msra.mxu0 0.0
    %1499 = vmatprep.subr.mxu0 0.0
    %1500 = vmatpush1.msra.mxu0 0.0
    %1501 = vmatprep.subr.mxu0 0.0
    %1502 = vmatpush1.msra.mxu0 0.0
    %1503 = vmatprep.subr.mxu0 0.0
    %1504 = vmatpush1.msra.mxu0 0.0
    %1505 = vmatprep.subr.mxu0 0.0
    %1506 = vmatpush1.msra.mxu0 0.0
    %1507 = vmatprep.subr.mxu0 0.0
    %1508 = vmatpush1.msra.mxu0 0.0
    %1509 = vmatprep.subr.mxu0 0.0
    %1510 = vmatpush1.msra.mxu0 0.0
    %1511 = vmatprep.subr.mxu0 0.0
    %1512 = vmatpush1.msra.mxu0 0.0
    %1513 = vmatprep.subr.mxu0 0.0
    %1514 = vmatpush1.msra.mxu0 0.0
    %1515 = vmatprep.subr.mxu0 0.0
    %1516 = vmatpush1.msra.mxu0 0.0
    %1517 = vmatprep.subr.mxu0 0.0
    %1518 = vmatpush1.msra.mxu0 0.0
    %1519 = vmatprep.subr.mxu0 0.0
    %1520 = vmatpush1.msra.mxu0 0.0
    %1521 = vmatprep.subr.mxu0 0.0
    %1522 = vmatpush1.msra.mxu0 0.0
    %1523 = vmatprep.subr.mxu0 0.0
    %1524 = vmatpush1.msra.mxu0 0.0
    %1525 = vmatprep.subr.mxu0 0.0
    %1526 = vmatpush1.msra.mxu0 0.0
    %1527 = vmatprep.subr.mxu0 0.0
    %1528 = vmatpush1.msra.mxu0 0.0
    %1529 = vmatprep.subr.mxu0 0.0
    %1530 = vmatpush1.msra.mxu0 0.0
    %1531 = vmatprep.mubr.f32.mxu0 0.0
    %1532 = vmatmul.mubr.f32.gmra.mrb[0].mxu0 %v1465
    %v1533 = vpop.f32.mrb[0].mxu0
    %v1534 = vadd.f32 %v237, %v1533
    %v1535 = vpop.f32.mrb[0].mxu0
    %1536 = vdwg.mxu0
    %v1538 = vsel %vm323, %v1391, 0
    %v1541 = vsel %vm323, %v1461, 0
    %1543 = vmatprep.subr.mxu0 0.0
    %1544 = vmatpush1.xpose.msra.mxu0 %v1541
    %1545 = vmatprep.subr.mxu0 0.0
    %1546 = vmatpush1.xpose.msra.mxu0 0.0
    %1547 = vmatprep.subr.mxu0 0.0
    %1548 = vmatpush1.xpose.msra.mxu0 0.0
    %1549 = vmatprep.subr.mxu0 0.0
    %1550 = vmatpush1.xpose.msra.mxu0 0.0
    %1551 = vmatprep.subr.mxu0 0.0
    %1552 = vmatpush1.xpose.msra.mxu0 0.0
    %1553 = vmatprep.subr.mxu0 0.0
    %1554 = vmatpush1.xpose.msra.mxu0 0.0
    %1555 = vmatprep.subr.mxu0 0.0
    %1556 = vmatpush1.xpose.msra.mxu0 0.0
    %1557 = vmatprep.subr.mxu0 0.0
    %1558 = vmatpush1.xpose.msra.mxu0 0.0
    %1559 = vmatprep.subr.mxu0 0.0
    %1560 = vmatpush1.xpose.msra.mxu0 0.0
    %1561 = vmatprep.subr.mxu0 0.0
    %1562 = vmatpush1.xpose.msra.mxu0 0.0
    %1563 = vmatprep.subr.mxu0 0.0
    %1564 = vmatpush1.xpose.msra.mxu0 0.0
    %1565 = vmatprep.subr.mxu0 0.0
    %1566 = vmatpush1.xpose.msra.mxu0 0.0
    %1567 = vmatprep.subr.mxu0 0.0
    %1568 = vmatpush1.xpose.msra.mxu0 0.0
    %1569 = vmatprep.subr.mxu0 0.0
    %1570 = vmatpush1.xpose.msra.mxu0 0.0
    %1571 = vmatprep.subr.mxu0 0.0
    %1572 = vmatpush1.xpose.msra.mxu0 0.0
    %1573 = vmatprep.subr.mxu0 0.0
    %1574 = vmatpush1.xpose.msra.mxu0 0.0
    %1575 = vmatprep.subr.mxu0 0.0
    %1576 = vmatpush1.xpose.msra.mxu0 0.0
    %1577 = vmatprep.subr.mxu0 0.0
    %1578 = vmatpush1.xpose.msra.mxu0 0.0
    %1579 = vmatprep.subr.mxu0 0.0
    %1580 = vmatpush1.xpose.msra.mxu0 0.0
    %1581 = vmatprep.subr.mxu0 0.0
    %1582 = vmatpush1.xpose.msra.mxu0 0.0
    %1583 = vmatprep.subr.mxu0 0.0
    %1584 = vmatpush1.xpose.msra.mxu0 0.0
    %1585 = vmatprep.subr.mxu0 0.0
    %1586 = vmatpush1.xpose.msra.mxu0 0.0
    %1587 = vmatprep.subr.mxu0 0.0
    %1588 = vmatpush1.xpose.msra.mxu0 0.0
    %1589 = vmatprep.subr.mxu0 0.0
    %1590 = vmatpush1.xpose.msra.mxu0 0.0
    %1591 = vmatprep.subr.mxu0 0.0
    %1592 = vmatpush1.xpose.msra.mxu0 0.0
    %1593 = vmatprep.subr.mxu0 0.0
    %1594 = vmatpush1.xpose.msra.mxu0 0.0
    %1595 = vmatprep.subr.mxu0 0.0
    %1596 = vmatpush1.xpose.msra.mxu0 0.0
    %1597 = vmatprep.subr.mxu0 0.0
    %1598 = vmatpush1.xpose.msra.mxu0 0.0
    %1599 = vmatprep.subr.mxu0 0.0
    %1600 = vmatpush1.xpose.msra.mxu0 0.0
    %1601 = vmatprep.subr.mxu0 0.0
    %1602 = vmatpush1.xpose.msra.mxu0 0.0
    %1603 = vmatprep.subr.mxu0 0.0
    %1604 = vmatpush1.xpose.msra.mxu0 0.0
    %1605 = vmatprep.subr.mxu0 0.0
    %1606 = vmatpush1.xpose.msra.mxu0 0.0
    %1607 = vmatprep.mubr.f32.mxu0 0.0
    %1608 = vmatmul.mubr.f32.gmra.mrb[0].mxu0 %v1538
    %v1609 = vpop.f32.mrb[0].mxu0
    %v1610 = vadd.f32 0.0, %v1609
    %v1611 = vpop.f32.mrb[0].mxu0
    %1612 = vdwg.mxu0
    %v1613 = vsel %vm323, %v1610, -inf
    %1614 = vmax.xlane.f32.xlu0 %v1613
    %v1615 = vpop.xlane.xlu0 %1614
    %v1616 = vsub.f32 %v1610, %v1615
    %v1617 = vmul.f32 %v1616, 1.442695
    %v1618 = vpow.pop %v1617
    %v1619 = vsel %vm323, %v1618, 0.0
    %1620 = vadd.xlane.f32.xlu0 %v1619
    %v1621 = vpop.xlane.xlu0 %1620
    %v1622 = vrcp.pop %v1621
    %v1623 = vmul.f32 %v1618, %v1622
    %v1625 = vsel %vm323, %v1623, 0
    %1627 = vmatprep.subr.mxu0 0.0
    %1628 = vmatpush1.msra.mxu0 %v1534
    %1629 = vmatprep.subr.mxu0 0.0
    %1630 = vmatpush1.msra.mxu0 0.0
    %1631 = vmatprep.subr.mxu0 0.0
    %1632 = vmatpush1.msra.mxu0 0.0
    %1633 = vmatprep.subr.mxu0 0.0
    %1634 = vmatpush1.msra.mxu0 0.0
    %1635 = vmatprep.subr.mxu0 0.0
    %1636 = vmatpush1.msra.mxu0 0.0
    %1637 = vmatprep.subr.mxu0 0.0
    %1638 = vmatpush1.msra.mxu0 0.0
    %1639 = vmatprep.subr.mxu0 0.0
    %1640 = vmatpush1.msra.mxu0 0.0
    %1641 = vmatprep.subr.mxu0 0.0
    %1642 = vmatpush1.msra.mxu0 0.0
    %1643 = vmatprep.subr.mxu0 0.0
    %1644 = vmatpush1.msra.mxu0 0.0
    %1645 = vmatprep.subr.mxu0 0.0
    %1646 = vmatpush1.msra.mxu0 0.0
    %1647 = vmatprep.subr.mxu0 0.0
    %1648 = vmatpush1.msra.mxu0 0.0
    %1649 = vmatprep.subr.mxu0 0.0
    %1650 = vmatpush1.msra.mxu0 0.0
    %1651 = vmatprep.subr.mxu0 0.0
    %1652 = vmatpush1.msra.mxu0 0.0
    %1653 = vmatprep.subr.mxu0 0.0
    %1654 = vmatpush1.msra.mxu0 0.0
    %1655 = vmatprep.subr.mxu0 0.0
    %1656 = vmatpush1.msra.mxu0 0.0
    %1657 = vmatprep.subr.mxu0 0.0
    %1658 = vmatpush1.msra.mxu0 0.0
    %1659 = vmatprep.subr.mxu0 0.0
    %1660 = vmatpush1.msra.mxu0 0.0
    %1661 = vmatprep.subr.mxu0 0.0
    %1662 = vmatpush1.msra.mxu0 0.0
    %1663 = vmatprep.subr.mxu0 0.0
    %1664 = vmatpush1.msra.mxu0 0.0
    %1665 = vmatprep.subr.mxu0 0.0
    %1666 = vmatpush1.msra.mxu0 0.0
    %1667 = vmatprep.subr.mxu0 0.0
    %1668 = vmatpush1.msra.mxu0 0.0
    %1669 = vmatprep.subr.mxu0 0.0
    %1670 = vmatpush1.msra.mxu0 0.0
    %1671 = vmatprep.subr.mxu0 0.0
    %1672 = vmatpush1.msra.mxu0 0.0
    %1673 = vmatprep.subr.mxu0 0.0
    %1674 = vmatpush1.msra.mxu0 0.0
    %1675 = vmatprep.subr.mxu0 0.0
    %1676 = vmatpush1.msra.mxu0 0.0
    %1677 = vmatprep.subr.mxu0 0.0
    %1678 = vmatpush1.msra.mxu0 0.0
    %1679 = vmatprep.subr.mxu0 0.0
    %1680 = vmatpush1.msra.mxu0 0.0
    %1681 = vmatprep.subr.mxu0 0.0
    %1682 = vmatpush1.msra.mxu0 0.0
    %1683 = vmatprep.subr.mxu0 0.0
    %1684 = vmatpush1.msra.mxu0 0.0
    %1685 = vmatprep.subr.mxu0 0.0
    %1686 = vmatpush1.msra.mxu0 0.0
    %1687 = vmatprep.subr.mxu0 0.0
    %1688 = vmatpush1.msra.mxu0 0.0
    %1689 = vmatprep.subr.mxu0 0.0
    %1690 = vmatpush1.msra.mxu0 0.0
    %1691 = vmatprep.mubr.f32.mxu0 0.0
    %1692 = vmatmul.mubr.f32.gmra.mrb[0].mxu0 %v1625
    %v1693 = vpop.f32.mrb[0].mxu0
    %v1694 = vadd.f32 0.0, %v1693
    %v1695 = vpop.f32.mrb[0].mxu0
    %1696 = vdwg.mxu0
    %1697 = vrot.lane.b32.xlu0 %v1391, 120
    %v1698 = vpop.permute.xlu0 %1697
    %1699 = vrot.lane.b32.xlu0 %v1461, 120
    %v1700 = vpop.permute.xlu0 %1699
    %v1701 = vsel %vm323, %v1698, 0
    %v1703 = vsel %vm323, %v1700, 0
    %1705 = vmatprep.subr.mxu0 0.0
    %1706 = vmatpush1.xpose.msra.mxu0 %v1703
    %1707 = vmatprep.subr.mxu0 0.0
    %1708 = vmatpush1.xpose.msra.mxu0 0.0
    %1709 = vmatprep.subr.mxu0 0.0
    %1710 = vmatpush1.xpose.msra.mxu0 0.0
    %1711 = vmatprep.subr.mxu0 0.0
    %1712 = vmatpush1.xpose.msra.mxu0 0.0
    %1713 = vmatprep.subr.mxu0 0.0
    %1714 = vmatpush1.xpose.msra.mxu0 0.0
    %1715 = vmatprep.subr.mxu0 0.0
    %1716 = vmatpush1.xpose.msra.mxu0 0.0
    %1717 = vmatprep.subr.mxu0 0.0
    %1718 = vmatpush1.xpose.msra.mxu0 0.0
    %1719 = vmatprep.subr.mxu0 0.0
    %1720 = vmatpush1.xpose.msra.mxu0 0.0
    %1721 = vmatprep.subr.mxu0 0.0
    %1722 = vmatpush1.xpose.msra.mxu0 0.0
    %1723 = vmatprep.subr.mxu0 0.0
    %1724 = vmatpush1.xpose.msra.mxu0 0.0
    %1725 = vmatprep.subr.mxu0 0.0
    %1726 = vmatpush1.xpose.msra.mxu0 0.0
    %1727 = vmatprep.subr.mxu0 0.0
    %1728 = vmatpush1.xpose.msra.mxu0 0.0
    %1729 = vmatprep.subr.mxu0 0.0
    %1730 = vmatpush1.xpose.msra.mxu0 0.0
    %1731 = vmatprep.subr.mxu0 0.0
    %1732 = vmatpush1.xpose.msra.mxu0 0.0
    %1733 = vmatprep.subr.mxu0 0.0
    %1734 = vmatpush1.xpose.msra.mxu0 0.0
    %1735 = vmatprep.subr.mxu0 0.0
    %1736 = vmatpush1.xpose.msra.mxu0 0.0
    %1737 = vmatprep.subr.mxu0 0.0
    %1738 = vmatpush1.xpose.msra.mxu0 0.0
    %1739 = vmatprep.subr.mxu0 0.0
    %1740 = vmatpush1.xpose.msra.mxu0 0.0
    %1741 = vmatprep.subr.mxu0 0.0
    %1742 = vmatpush1.xpose.msra.mxu0 0.0
    %1743 = vmatprep.subr.mxu0 0.0
    %1744 = vmatpush1.xpose.msra.mxu0 0.0
    %1745 = vmatprep.subr.mxu0 0.0
    %1746 = vmatpush1.xpose.msra.mxu0 0.0
    %1747 = vmatprep.subr.mxu0 0.0
    %1748 = vmatpush1.xpose.msra.mxu0 0.0
    %1749 = vmatprep.subr.mxu0 0.0
    %1750 = vmatpush1.xpose.msra.mxu0 0.0
    %1751 = vmatprep.subr.mxu0 0.0
    %1752 = vmatpush1.xpose.msra.mxu0 0.0
    %1753 = vmatprep.subr.mxu0 0.0
    %1754 = vmatpush1.xpose.msra.mxu0 0.0
    %1755 = vmatprep.subr.mxu0 0.0
    %1756 = vmatpush1.xpose.msra.mxu0 0.0
    %1757 = vmatprep.subr.mxu0 0.0
    %1758 = vmatpush1.xpose.msra.mxu0 0.0
    %1759 = vmatprep.subr.mxu0 0.0
    %1760 = vmatpush1.xpose.msra.mxu0 0.0
    %1761 = vmatprep.subr.mxu0 0.0
    %1762 = vmatpush1.xpose.msra.mxu0 0.0
    %1763 = vmatprep.subr.mxu0 0.0
    %1764 = vmatpush1.xpose.msra.mxu0 0.0
    %1765 = vmatprep.subr.mxu0 0.0
    %1766 = vmatpush1.xpose.msra.mxu0 0.0
    %1767 = vmatprep.subr.mxu0 0.0
    %1768 = vmatpush1.xpose.msra.mxu0 0.0
    %1769 = vmatprep.mubr.f32.mxu0 0.0
    %1770 = vmatmul.mubr.f32.gmra.mrb[0].mxu0 %v1701
    %v1771 = vpop.f32.mrb[0].mxu0
    %v1772 = vadd.f32 0.0, %v1771
    %v1773 = vpop.f32.mrb[0].mxu0
    %1774 = vdwg.mxu0
    %v1775 = vsel %vm323, %v1772, -inf
    %1776 = vmax.xlane.f32.xlu0 %v1775
    %v1777 = vpop.xlane.xlu0 %1776
    %v1778 = vsub.f32 %v1772, %v1777
    %v1779 = vmul.f32 %v1778, 1.442695
    %v1780 = vpow.pop %v1779
    %v1781 = vsel %vm323, %v1780, 0.0
    %1782 = vadd.xlane.f32.xlu0 %v1781
    %v1783 = vpop.xlane.xlu0 %1782
    %v1784 = vrcp.pop %v1783
    %v1785 = vmul.f32 %v1780, %v1784
    %1787 = vrot.lane.b32.xlu0 %v1534, 120
    %v1788 = vpop.permute.xlu0 %1787
    %v1791 = vsel %vm323, %v1785, 0
    %1793 = vmatprep.subr.mxu0 0.0
    %1794 = vmatpush1.msra.mxu0 %v1788
    %1795 = vmatprep.subr.mxu0 0.0
    %1796 = vmatpush1.msra.mxu0 0.0
    %1797 = vmatprep.subr.mxu0 0.0
    %1798 = vmatpush1.msra.mxu0 0.0
    %1799 = vmatprep.subr.mxu0 0.0
    %1800 = vmatpush1.msra.mxu0 0.0
    %1801 = vmatprep.subr.mxu0 0.0
    %1802 = vmatpush1.msra.mxu0 0.0
    %1803 = vmatprep.subr.mxu0 0.0
    %1804 = vmatpush1.msra.mxu0 0.0
    %1805 = vmatprep.subr.mxu0 0.0
    %1806 = vmatpush1.msra.mxu0 0.0
    %1807 = vmatprep.subr.mxu0 0.0
    %1808 = vmatpush1.msra.mxu0 0.0
    %1809 = vmatprep.subr.mxu0 0.0
    %1810 = vmatpush1.msra.mxu0 0.0
    %1811 = vmatprep.subr.mxu0 0.0
    %1812 = vmatpush1.msra.mxu0 0.0
    %1813 = vmatprep.subr.mxu0 0.0
    %1814 = vmatpush1.msra.mxu0 0.0
    %1815 = vmatprep.subr.mxu0 0.0
    %1816 = vmatpush1.msra.mxu0 0.0
    %1817 = vmatprep.subr.mxu0 0.0
    %1818 = vmatpush1.msra.mxu0 0.0
    %1819 = vmatprep.subr.mxu0 0.0
    %1820 = vmatpush1.msra.mxu0 0.0
    %1821 = vmatprep.subr.mxu0 0.0
    %1822 = vmatpush1.msra.mxu0 0.0
    %1823 = vmatprep.subr.mxu0 0.0
    %1824 = vmatpush1.msra.mxu0 0.0
    %1825 = vmatprep.subr.mxu0 0.0
    %1826 = vmatpush1.msra.mxu0 0.0
    %1827 = vmatprep.subr.mxu0 0.0
    %1828 = vmatpush1.msra.mxu0 0.0
    %1829 = vmatprep.subr.mxu0 0.0
    %1830 = vmatpush1.msra.mxu0 0.0
    %1831 = vmatprep.subr.mxu0 0.0
    %1832 = vmatpush1.msra.mxu0 0.0
    %1833 = vmatprep.subr.mxu0 0.0
    %1834 = vmatpush1.msra.mxu0 0.0
    %1835 = vmatprep.subr.mxu0 0.0
    %1836 = vmatpush1.msra.mxu0 0.0
    %1837 = vmatprep.subr.mxu0 0.0
    %1838 = vmatpush1.msra.mxu0 0.0
    %1839 = vmatprep.subr.mxu0 0.0
    %1840 = vmatpush1.msra.mxu0 0.0
    %1841 = vmatprep.subr.mxu0 0.0
    %1842 = vmatpush1.msra.mxu0 0.0
    %1843 = vmatprep.subr.mxu0 0.0
    %1844 = vmatpush1.msra.mxu0 0.0
    %1845 = vmatprep.subr.mxu0 0.0
    %1846 = vmatpush1.msra.mxu0 0.0
    %1847 = vmatprep.subr.mxu0 0.0
    %1848 = vmatpush1.msra.mxu0 0.0
    %1849 = vmatprep.subr.mxu0 0.0
    %1850 = vmatpush1.msra.mxu0 0.0
    %1851 = vmatprep.subr.mxu0 0.0
    %1852 = vmatpush1.msra.mxu0 0.0
    %1853 = vmatprep.subr.mxu0 0.0
    %1854 = vmatpush1.msra.mxu0 0.0
    %1855 = vmatprep.subr.mxu0 0.0
    %1856 = vmatpush1.msra.mxu0 0.0
    %1857 = vmatprep.mubr.f32.mxu0 0.0
    %1858 = vmatmul.mubr.f32.gmra.mrb[0].mxu0 %v1791
    %v1859 = vpop.f32.mrb[0].mxu0
    %v1860 = vadd.f32 0.0, %v1859
    %v1861 = vpop.f32.mrb[0].mxu0
    %1862 = vdwg.mxu0
    %v1864 = vsel %vm323, %v1860, 0
    %1866 = vmatprep.subr.mxu0 0.0
    %1867 = vmatpush1.msra.mxu0 %v651
    %1868 = vmatprep.subr.mxu0 0.0
    %1869 = vmatpush1.msra.mxu0 0.0
    %1870 = vmatprep.subr.mxu0 0.0
    %1871 = vmatpush1.msra.mxu0 0.0
    %1872 = vmatprep.subr.mxu0 0.0
    %1873 = vmatpush1.msra.mxu0 0.0
    %1874 = vmatprep.subr.mxu0 0.0
    %1875 = vmatpush1.msra.mxu0 0.0
    %1876 = vmatprep.subr.mxu0 0.0
    %1877 = vmatpush1.msra.mxu0 0.0
    %1878 = vmatprep.subr.mxu0 0.0
    %1879 = vmatpush1.msra.mxu0 0.0
    %1880 = vmatprep.subr.mxu0 0.0
    %1881 = vmatpush1.msra.mxu0 0.0
    %1882 = vmatprep.subr.mxu0 0.0
    %1883 = vmatpush1.msra.mxu0 0.0
    %1884 = vmatprep.subr.mxu0 0.0
    %1885 = vmatpush1.msra.mxu0 0.0
    %1886 = vmatprep.subr.mxu0 0.0
    %1887 = vmatpush1.msra.mxu0 0.0
    %1888 = vmatprep.subr.mxu0 0.0
    %1889 = vmatpush1.msra.mxu0 0.0
    %1890 = vmatprep.subr.mxu0 0.0
    %1891 = vmatpush1.msra.mxu0 0.0
    %1892 = vmatprep.subr.mxu0 0.0
    %1893 = vmatpush1.msra.mxu0 0.0
    %1894 = vmatprep.subr.mxu0 0.0
    %1895 = vmatpush1.msra.mxu0 0.0
    %1896 = vmatprep.subr.mxu0 0.0
    %1897 = vmatpush1.msra.mxu0 0.0
    %1898 = vmatprep.subr.mxu0 0.0
    %1899 = vmatpush1.msra.mxu0 0.0
    %1900 = vmatprep.subr.mxu0 0.0
    %1901 = vmatpush1.msra.mxu0 0.0
    %1902 = vmatprep.subr.mxu0 0.0
    %1903 = vmatpush1.msra.mxu0 0.0
    %1904 = vmatprep.subr.mxu0 0.0
    %1905 = vmatpush1.msra.mxu0 0.0
    %1906 = vmatprep.subr.mxu0 0.0
    %1907 = vmatpush1.msra.mxu0 0.0
    %1908 = vmatprep.subr.mxu0 0.0
    %1909 = vmatpush1.msra.mxu0 0.0
    %1910 = vmatprep.subr.mxu0 0.0
    %1911 = vmatpush1.msra.mxu0 0.0
    %1912 = vmatprep.subr.mxu0 0.0
    %1913 = vmatpush1.msra.mxu0 0.0
    %1914 = vmatprep.subr.mxu0 0.0
    %1915 = vmatpush1.msra.mxu0 0.0
    %1916 = vmatprep.subr.mxu0 0.0
    %1917 = vmatpush1.msra.mxu0 0.0
    %1918 = vmatprep.subr.mxu0 0.0
    %1919 = vmatpush1.msra.mxu0 0.0
    %1920 = vmatprep.subr.mxu0 0.0
    %1921 = vmatpush1.msra.mxu0 0.0
    %1922 = vmatprep.subr.mxu0 0.0
    %1923 = vmatpush1.msra.mxu0 0.0
    %1924 = vmatprep.subr.mxu0 0.0
    %1925 = vmatpush1.msra.mxu0 0.0
    %1926 = vmatprep.subr.mxu0 0.0
    %1927 = vmatpush1.msra.mxu0 0.0
    %1928 = vmatprep.subr.mxu0 0.0
    %1929 = vmatpush1.msra.mxu0 0.0
    %1930 = vmatprep.mubr.f32.mxu0 0.0
    %1931 = vmatmul.mubr.f32.gmra.mrb[0].mxu0 %v1864
    %v1932 = vpop.f32.mrb[0].mxu0
    %v1933 = vadd.f32 0.0, %v1932
    %v1934 = vpop.f32.mrb[0].mxu0
    %1935 = vdwg.mxu0
    %v1937 = vsel %vm323, %v1694, 0
    %1939 = vmatprep.subr.mxu0 0.0
    %1940 = vmatpush1.msra.mxu0 %v727
    %1941 = vmatprep.subr.mxu0 0.0
    %1942 = vmatpush1.msra.mxu0 0.0
    %1943 = vmatprep.subr.mxu0 0.0
    %1944 = vmatpush1.msra.mxu0 0.0
    %1945 = vmatprep.subr.mxu0 0.0
    %1946 = vmatpush1.msra.mxu0 0.0
    %1947 = vmatprep.subr.mxu0 0.0
    %1948 = vmatpush1.msra.mxu0 0.0
    %1949 = vmatprep.subr.mxu0 0.0
    %1950 = vmatpush1.msra.mxu0 0.0
    %1951 = vmatprep.subr.mxu0 0.0
    %1952 = vmatpush1.msra.mxu0 0.0
    %1953 = vmatprep.subr.mxu0 0.0
    %1954 = vmatpush1.msra.mxu0 0.0
    %1955 = vmatprep.subr.mxu0 0.0
    %1956 = vmatpush1.msra.mxu0 0.0
    %1957 = vmatprep.subr.mxu0 0.0
    %1958 = vmatpush1.msra.mxu0 0.0
    %1959 = vmatprep.subr.mxu0 0.0
    %1960 = vmatpush1.msra.mxu0 0.0
    %1961 = vmatprep.subr.mxu0 0.0
    %1962 = vmatpush1.msra.mxu0 0.0
    %1963 = vmatprep.subr.mxu0 0.0
    %1964 = vmatpush1.msra.mxu0 0.0
    %1965 = vmatprep.subr.mxu0 0.0
    %1966 = vmatpush1.msra.mxu0 0.0
    %1967 = vmatprep.subr.mxu0 0.0
    %1968 = vmatpush1.msra.mxu0 0.0
    %1969 = vmatprep.subr.mxu0 0.0
    %1970 = vmatpush1.msra.mxu0 0.0
    %1971 = vmatprep.subr.mxu0 0.0
    %1972 = vmatpush1.msra.mxu0 0.0
    %1973 = vmatprep.subr.mxu0 0.0
    %1974 = vmatpush1.msra.mxu0 0.0
    %1975 = vmatprep.subr.mxu0 0.0
    %1976 = vmatpush1.msra.mxu0 0.0
    %1977 = vmatprep.subr.mxu0 0.0
    %1978 = vmatpush1.msra.mxu0 0.0
    %1979 = vmatprep.subr.mxu0 0.0
    %1980 = vmatpush1.msra.mxu0 0.0
    %1981 = vmatprep.subr.mxu0 0.0
    %1982 = vmatpush1.msra.mxu0 0.0
    %1983 = vmatprep.subr.mxu0 0.0
    %1984 = vmatpush1.msra.mxu0 0.0
    %1985 = vmatprep.subr.mxu0 0.0
    %1986 = vmatpush1.msra.mxu0 0.0
    %1987 = vmatprep.subr.mxu0 0.0
    %1988 = vmatpush1.msra.mxu0 0.0
    %1989 = vmatprep.subr.mxu0 0.0
    %1990 = vmatpush1.msra.mxu0 0.0
    %1991 = vmatprep.subr.mxu0 0.0
    %1992 = vmatpush1.msra.mxu0 0.0
    %1993 = vmatprep.subr.mxu0 0.0
    %1994 = vmatpush1.msra.mxu0 0.0
    %1995 = vmatprep.subr.mxu0 0.0
    %1996 = vmatpush1.msra.mxu0 0.0
    %1997 = vmatprep.subr.mxu0 0.0
    %1998 = vmatpush1.msra.mxu0 0.0
    %1999 = vmatprep.subr.mxu0 0.0
    %2000 = vmatpush1.msra.mxu0 0.0
    %2001 = vmatprep.subr.mxu0 0.0
    %2002 = vmatpush1.msra.mxu0 0.0
    %2003 = vmatprep.mubr.f32.mxu0 0.0
    %2004 = vmatmul.mubr.f32.gmra.mrb[0].mxu0 %v1937
    %v2005 = vpop.f32.mrb[0].mxu0
    %v2006 = vadd.f32 %v1933, %v2005
    %v2007 = vpop.f32.mrb[0].mxu0
    %2008 = vdwg.mxu0
    %2009 = vrot.lane.b32.xlu0 %v1391, 112
    %v2010 = vpop.permute.xlu0 %2009
    %2011 = vrot.lane.b32.xlu0 %v1461, 112
    %v2012 = vpop.permute.xlu0 %2011
    %v2013 = vsel %vm323, %v2010, 0
    %v2015 = vsel %vm323, %v2012, 0
    %2017 = vmatprep.subr.mxu0 0.0
    %2018 = vmatpush1.xpose.msra.mxu0 %v2015
    %2019 = vmatprep.subr.mxu0 0.0
    %2020 = vmatpush1.xpose.msra.mxu0 0.0
    %2021 = vmatprep.subr.mxu0 0.0
    %2022 = vmatpush1.xpose.msra.mxu0 0.0
    %2023 = vmatprep.subr.mxu0 0.0
    %2024 = vmatpush1.xpose.msra.mxu0 0.0
    %2025 = vmatprep.subr.mxu0 0.0
    %2026 = vmatpush1.xpose.msra.mxu0 0.0
    %2027 = vmatprep.subr.mxu0 0.0
    %2028 = vmatpush1.xpose.msra.mxu0 0.0
    %2029 = vmatprep.subr.mxu0 0.0
    %2030 = vmatpush1.xpose.msra.mxu0 0.0
    %2031 = vmatprep.subr.mxu0 0.0
    %2032 = vmatpush1.xpose.msra.mxu0 0.0
    %2033 = vmatprep.subr.mxu0 0.0
    %2034 = vmatpush1.xpose.msra.mxu0 0.0
    %2035 = vmatprep.subr.mxu0 0.0
    %2036 = vmatpush1.xpose.msra.mxu0 0.0
    %2037 = vmatprep.subr.mxu0 0.0
    %2038 = vmatpush1.xpose.msra.mxu0 0.0
    %2039 = vmatprep.subr.mxu0 0.0
    %2040 = vmatpush1.xpose.msra.mxu0 0.0
    %2041 = vmatprep.subr.mxu0 0.0
    %2042 = vmatpush1.xpose.msra.mxu0 0.0
    %2043 = vmatprep.subr.mxu0 0.0
    %2044 = vmatpush1.xpose.msra.mxu0 0.0
    %2045 = vmatprep.subr.mxu0 0.0
    %2046 = vmatpush1.xpose.msra.mxu0 0.0
    %2047 = vmatprep.subr.mxu0 0.0
    %2048 = vmatpush1.xpose.msra.mxu0 0.0
    %2049 = vmatprep.subr.mxu0 0.0
    %2050 = vmatpush1.xpose.msra.mxu0 0.0
    %2051 = vmatprep.subr.mxu0 0.0
    %2052 = vmatpush1.xpose.msra.mxu0 0.0
    %2053 = vmatprep.subr.mxu0 0.0
    %2054 = vmatpush1.xpose.msra.mxu0 0.0
    %2055 = vmatprep.subr.mxu0 0.0
    %2056 = vmatpush1.xpose.msra.mxu0 0.0
    %2057 = vmatprep.subr.mxu0 0.0
    %2058 = vmatpush1.xpose.msra.mxu0 0.0
    %2059 = vmatprep.subr.mxu0 0.0
    %2060 = vmatpush1.xpose.msra.mxu0 0.0
    %2061 = vmatprep.subr.mxu0 0.0
    %2062 = vmatpush1.xpose.msra.mxu0 0.0
    %2063 = vmatprep.subr.mxu0 0.0
    %2064 = vmatpush1.xpose.msra.mxu0 0.0
    %2065 = vmatprep.subr.mxu0 0.0
    %2066 = vmatpush1.xpose.msra.mxu0 0.0
    %2067 = vmatprep.subr.mxu0 0.0
    %2068 = vmatpush1.xpose.msra.mxu0 0.0
    %2069 = vmatprep.subr.mxu0 0.0
    %2070 = vmatpush1.xpose.msra.mxu0 0.0
    %2071 = vmatprep.subr.mxu0 0.0
    %2072 = vmatpush1.xpose.msra.mxu0 0.0
    %2073 = vmatprep.subr.mxu0 0.0
    %2074 = vmatpush1.xpose.msra.mxu0 0.0
    %2075 = vmatprep.subr.mxu0 0.0
    %2076 = vmatpush1.xpose.msra.mxu0 0.0
    %2077 = vmatprep.subr.mxu0 0.0
    %2078 = vmatpush1.xpose.msra.mxu0 0.0
    %2079 = vmatprep.subr.mxu0 0.0
    %2080 = vmatpush1.xpose.msra.mxu0 0.0
    %2081 = vmatprep.mubr.f32.mxu0 0.0
    %2082 = vmatmul.mubr.f32.gmra.mrb[0].mxu0 %v2013
    %v2083 = vpop.f32.mrb[0].mxu0
    %v2084 = vadd.f32 0.0, %v2083
    %v2085 = vpop.f32.mrb[0].mxu0
    %2086 = vdwg.mxu0
    %v2087 = vsel %vm323, %v2084, -inf
    %2088 = vmax.xlane.f32.xlu0 %v2087
    %v2089 = vpop.xlane.xlu0 %2088
    %v2090 = vsub.f32 %v2084, %v2089
    %v2091 = vmul.f32 %v2090, 1.442695
    %v2092 = vpow.pop %v2091
    %v2093 = vsel %vm323, %v2092, 0.0
    %2094 = vadd.xlane.f32.xlu0 %v2093
    %v2095 = vpop.xlane.xlu0 %2094
    %v2096 = vrcp.pop %v2095
    %v2097 = vmul.f32 %v2092, %v2096
    %2098 = vrot.lane.b32.xlu0 %v1534, 112
    %v2099 = vpop.permute.xlu0 %2098
    %v2102 = vsel %vm323, %v2097, 0
    %2104 = vmatprep.subr.mxu0 0.0
    %2105 = vmatpush1.msra.mxu0 %v2099
    %2106 = vmatprep.subr.mxu0 0.0
    %2107 = vmatpush1.msra.mxu0 0.0
    %2108 = vmatprep.subr.mxu0 0.0
    %2109 = vmatpush1.msra.mxu0 0.0
    %2110 = vmatprep.subr.mxu0 0.0
    %2111 = vmatpush1.msra.mxu0 0.0
    %2112 = vmatprep.subr.mxu0 0.0
    %2113 = vmatpush1.msra.mxu0 0.0
    %2114 = vmatprep.subr.mxu0 0.0
    %2115 = vmatpush1.msra.mxu0 0.0
    %2116 = vmatprep.subr.mxu0 0.0
    %2117 = vmatpush1.msra.mxu0 0.0
    %2118 = vmatprep.subr.mxu0 0.0
    %2119 = vmatpush1.msra.mxu0 0.0
    %2120 = vmatprep.subr.mxu0 0.0
    %2121 = vmatpush1.msra.mxu0 0.0
    %2122 = vmatprep.subr.mxu0 0.0
    %2123 = vmatpush1.msra.mxu0 0.0
    %2124 = vmatprep.subr.mxu0 0.0
    %2125 = vmatpush1.msra.mxu0 0.0
    %2126 = vmatprep.subr.mxu0 0.0
    %2127 = vmatpush1.msra.mxu0 0.0
    %2128 = vmatprep.subr.mxu0 0.0
    %2129 = vmatpush1.msra.mxu0 0.0
    %2130 = vmatprep.subr.mxu0 0.0
    %2131 = vmatpush1.msra.mxu0 0.0
    %2132 = vmatprep.subr.mxu0 0.0
    %2133 = vmatpush1.msra.mxu0 0.0
    %2134 = vmatprep.subr.mxu0 0.0
    %2135 = vmatpush1.msra.mxu0 0.0
    %2136 = vmatprep.subr.mxu0 0.0
    %2137 = vmatpush1.msra.mxu0 0.0
    %2138 = vmatprep.subr.mxu0 0.0
    %2139 = vmatpush1.msra.mxu0 0.0
    %2140 = vmatprep.subr.mxu0 0.0
    %2141 = vmatpush1.msra.mxu0 0.0
    %2142 = vmatprep.subr.mxu0 0.0
    %2143 = vmatpush1.msra.mxu0 0.0
    %2144 = vmatprep.subr.mxu0 0.0
    %2145 = vmatpush1.msra.mxu0 0.0
    %2146 = vmatprep.subr.mxu0 0.0
    %2147 = vmatpush1.msra.mxu0 0.0
    %2148 = vmatprep.subr.mxu0 0.0
    %2149 = vmatpush1.msra.mxu0 0.0
    %2150 = vmatprep.subr.mxu0 0.0
    %2151 = vmatpush1.msra.mxu0 0.0
    %2152 = vmatprep.subr.mxu0 0.0
    %2153 = vmatpush1.msra.mxu0 0.0
    %2154 = vmatprep.subr.mxu0 0.0
    %2155 = vmatpush1.msra.mxu0 0.0
    %2156 = vmatprep.subr.mxu0 0.0
    %2157 = vmatpush1.msra.mxu0 0.0
    %2158 = vmatprep.subr.mxu0 0.0
    %2159 = vmatpush1.msra.mxu0 0.0
    %2160 = vmatprep.subr.mxu0 0.0
    %2161 = vmatpush1.msra.mxu0 0.0
    %2162 = vmatprep.subr.mxu0 0.0
    %2163 = vmatpush1.msra.mxu0 0.0
    %2164 = vmatprep.subr.mxu0 0.0
    %2165 = vmatpush1.msra.mxu0 0.0
    %2166 = vmatprep.subr.mxu0 0.0
    %2167 = vmatpush1.msra.mxu0 0.0
    %2168 = vmatprep.mubr.f32.mxu0 0.0
    %2169 = vmatmul.mubr.f32.gmra.mrb[0].mxu0 %v2102
    %v2170 = vpop.f32.mrb[0].mxu0
    %v2171 = vadd.f32 0.0, %v2170
    %v2172 = vpop.f32.mrb[0].mxu0
    %2173 = vdwg.mxu0
    %v2175 = vsel %vm323, %v2171, 0
    %2177 = vmatprep.subr.mxu0 0.0
    %2178 = vmatpush1.msra.mxu0 %v968
    %2179 = vmatprep.subr.mxu0 0.0
    %2180 = vmatpush1.msra.mxu0 0.0
    %2181 = vmatprep.subr.mxu0 0.0
    %2182 = vmatpush1.msra.mxu0 0.0
    %2183 = vmatprep.subr.mxu0 0.0
    %2184 = vmatpush1.msra.mxu0 0.0
    %2185 = vmatprep.subr.mxu0 0.0
    %2186 = vmatpush1.msra.mxu0 0.0
    %2187 = vmatprep.subr.mxu0 0.0
    %2188 = vmatpush1.msra.mxu0 0.0
    %2189 = vmatprep.subr.mxu0 0.0
    %2190 = vmatpush1.msra.mxu0 0.0
    %2191 = vmatprep.subr.mxu0 0.0
    %2192 = vmatpush1.msra.mxu0 0.0
    %2193 = vmatprep.subr.mxu0 0.0
    %2194 = vmatpush1.msra.mxu0 0.0
    %2195 = vmatprep.subr.mxu0 0.0
    %2196 = vmatpush1.msra.mxu0 0.0
    %2197 = vmatprep.subr.mxu0 0.0
    %2198 = vmatpush1.msra.mxu0 0.0
    %2199 = vmatprep.subr.mxu0 0.0
    %2200 = vmatpush1.msra.mxu0 0.0
    %2201 = vmatprep.subr.mxu0 0.0
    %2202 = vmatpush1.msra.mxu0 0.0
    %2203 = vmatprep.subr.mxu0 0.0
    %2204 = vmatpush1.msra.mxu0 0.0
    %2205 = vmatprep.subr.mxu0 0.0
    %2206 = vmatpush1.msra.mxu0 0.0
    %2207 = vmatprep.subr.mxu0 0.0
    %2208 = vmatpush1.msra.mxu0 0.0
    %2209 = vmatprep.subr.mxu0 0.0
    %2210 = vmatpush1.msra.mxu0 0.0
    %2211 = vmatprep.subr.mxu0 0.0
    %2212 = vmatpush1.msra.mxu0 0.0
    %2213 = vmatprep.subr.mxu0 0.0
    %2214 = vmatpush1.msra.mxu0 0.0
    %2215 = vmatprep.subr.mxu0 0.0
    %2216 = vmatpush1.msra.mxu0 0.0
    %2217 = vmatprep.subr.mxu0 0.0
    %2218 = vmatpush1.msra.mxu0 0.0
    %2219 = vmatprep.subr.mxu0 0.0
    %2220 = vmatpush1.msra.mxu0 0.0
    %2221 = vmatprep.subr.mxu0 0.0
    %2222 = vmatpush1.msra.mxu0 0.0
    %2223 = vmatprep.subr.mxu0 0.0
    %2224 = vmatpush1.msra.mxu0 0.0
    %2225 = vmatprep.subr.mxu0 0.0
    %2226 = vmatpush1.msra.mxu0 0.0
    %2227 = vmatprep.subr.mxu0 0.0
    %2228 = vmatpush1.msra.mxu0 0.0
    %2229 = vmatprep.subr.mxu0 0.0
    %2230 = vmatpush1.msra.mxu0 0.0
    %2231 = vmatprep.subr.mxu0 0.0
    %2232 = vmatpush1.msra.mxu0 0.0
    %2233 = vmatprep.subr.mxu0 0.0
    %2234 = vmatpush1.msra.mxu0 0.0
    %2235 = vmatprep.subr.mxu0 0.0
    %2236 = vmatpush1.msra.mxu0 0.0
    %2237 = vmatprep.subr.mxu0 0.0
    %2238 = vmatpush1.msra.mxu0 0.0
    %2239 = vmatprep.subr.mxu0 0.0
    %2240 = vmatpush1.msra.mxu0 0.0
    %2241 = vmatprep.mubr.f32.mxu0 0.0
    %2242 = vmatmul.mubr.f32.gmra.mrb[0].mxu0 %v2175
    %v2243 = vpop.f32.mrb[0].mxu0
    %v2244 = vadd.f32 0.0, %v2243
    %v2245 = vpop.f32.mrb[0].mxu0
    %2246 = vdwg.mxu0
    %v2247 = vadd.f32 %v2006, %v2244
    %2248 = vrot.lane.b32.xlu0 %v1391, 104
    %v2249 = vpop.permute.xlu0 %2248
    %2250 = vrot.lane.b32.xlu0 %v1461, 104
    %v2251 = vpop.permute.xlu0 %2250
    %v2252 = vsel %vm323, %v2249, 0
    %v2254 = vsel %vm323, %v2251, 0
    %2256 = vmatprep.subr.mxu0 0.0
    %2257 = vmatpush1.xpose.msra.mxu0 %v2254
    %2258 = vmatprep.subr.mxu0 0.0
    %2259 = vmatpush1.xpose.msra.mxu0 0.0
    %2260 = vmatprep.subr.mxu0 0.0
    %2261 = vmatpush1.xpose.msra.mxu0 0.0
    %2262 = vmatprep.subr.mxu0 0.0
    %2263 = vmatpush1.xpose.msra.mxu0 0.0
    %2264 = vmatprep.subr.mxu0 0.0
    %2265 = vmatpush1.xpose.msra.mxu0 0.0
    %2266 = vmatprep.subr.mxu0 0.0
    %2267 = vmatpush1.xpose.msra.mxu0 0.0
    %2268 = vmatprep.subr.mxu0 0.0
    %2269 = vmatpush1.xpose.msra.mxu0 0.0
    %2270 = vmatprep.subr.mxu0 0.0
    %2271 = vmatpush1.xpose.msra.mxu0 0.0
    %2272 = vmatprep.subr.mxu0 0.0
    %2273 = vmatpush1.xpose.msra.mxu0 0.0
    %2274 = vmatprep.subr.mxu0 0.0
    %2275 = vmatpush1.xpose.msra.mxu0 0.0
    %2276 = vmatprep.subr.mxu0 0.0
    %2277 = vmatpush1.xpose.msra.mxu0 0.0
    %2278 = vmatprep.subr.mxu0 0.0
    %2279 = vmatpush1.xpose.msra.mxu0 0.0
    %2280 = vmatprep.subr.mxu0 0.0
    %2281 = vmatpush1.xpose.msra.mxu0 0.0
    %2282 = vmatprep.subr.mxu0 0.0
    %2283 = vmatpush1.xpose.msra.mxu0 0.0
    %2284 = vmatprep.subr.mxu0 0.0
    %2285 = vmatpush1.xpose.msra.mxu0 0.0
    %2286 = vmatprep.subr.mxu0 0.0
    %2287 = vmatpush1.xpose.msra.mxu0 0.0
    %2288 = vmatprep.subr.mxu0 0.0
    %2289 = vmatpush1.xpose.msra.mxu0 0.0
    %2290 = vmatprep.subr.mxu0 0.0
    %2291 = vmatpush1.xpose.msra.mxu0 0.0
    %2292 = vmatprep.subr.mxu0 0.0
    %2293 = vmatpush1.xpose.msra.mxu0 0.0
    %2294 = vmatprep.subr.mxu0 0.0
    %2295 = vmatpush1.xpose.msra.mxu0 0.0
    %2296 = vmatprep.subr.mxu0 0.0
    %2297 = vmatpush1.xpose.msra.mxu0 0.0
    %2298 = vmatprep.subr.mxu0 0.0
    %2299 = vmatpush1.xpose.msra.mxu0 0.0
    %2300 = vmatprep.subr.mxu0 0.0
    %2301 = vmatpush1.xpose.msra.mxu0 0.0
    %2302 = vmatprep.subr.mxu0 0.0
    %2303 = vmatpush1.xpose.msra.mxu0 0.0
    %2304 = vmatprep.subr.mxu0 0.0
    %2305 = vmatpush1.xpose.msra.mxu0 0.0
    %2306 = vmatprep.subr.mxu0 0.0
    %2307 = vmatpush1.xpose.msra.mxu0 0.0
    %2308 = vmatprep.subr.mxu0 0.0
    %2309 = vmatpush1.xpose.msra.mxu0 0.0
    %2310 = vmatprep.subr.mxu0 0.0
    %2311 = vmatpush1.xpose.msra.mxu0 0.0
    %2312 = vmatprep.subr.mxu0 0.0
    %2313 = vmatpush1.xpose.msra.mxu0 0.0
    %2314 = vmatprep.subr.mxu0 0.0
    %2315 = vmatpush1.xpose.msra.mxu0 0.0
    %2316 = vmatprep.subr.mxu0 0.0
    %2317 = vmatpush1.xpose.msra.mxu0 0.0
    %2318 = vmatprep.subr.mxu0 0.0
    %2319 = vmatpush1.xpose.msra.mxu0 0.0
    %2320 = vmatprep.mubr.f32.mxu0 0.0
    %2321 = vmatmul.mubr.f32.gmra.mrb[0].mxu0 %v2252
    %v2322 = vpop.f32.mrb[0].mxu0
    %v2323 = vadd.f32 0.0, %v2322
    %v2324 = vpop.f32.mrb[0].mxu0
    %2325 = vdwg.mxu0
    %v2326 = vsel %vm323, %v2323, -inf
    %2327 = vmax.xlane.f32.xlu0 %v2326
    %v2328 = vpop.xlane.xlu0 %2327
    %v2329 = vsub.f32 %v2323, %v2328
    %v2330 = vmul.f32 %v2329, 1.442695
    %v2331 = vpow.pop %v2330
    %v2332 = vsel %vm323, %v2331, 0.0
    %2333 = vadd.xlane.f32.xlu0 %v2332
    %v2334 = vpop.xlane.xlu0 %2333
    %v2335 = vrcp.pop %v2334
    %v2336 = vmul.f32 %v2331, %v2335
    %2337 = vrot.lane.b32.xlu0 %v1534, 104
    %v2338 = vpop.permute.xlu0 %2337
    %v2341 = vsel %vm323, %v2336, 0
    %2343 = vmatprep.subr.mxu0 0.0
    %2344 = vmatpush1.msra.mxu0 %v2338
    %2345 = vmatprep.subr.mxu0 0.0
    %2346 = vmatpush1.msra.mxu0 0.0
    %2347 = vmatprep.subr.mxu0 0.0
    %2348 = vmatpush1.msra.mxu0 0.0
    %2349 = vmatprep.subr.mxu0 0.0
    %2350 = vmatpush1.msra.mxu0 0.0
    %2351 = vmatprep.subr.mxu0 0.0
    %2352 = vmatpush1.msra.mxu0 0.0
    %2353 = vmatprep.subr.mxu0 0.0
    %2354 = vmatpush1.msra.mxu0 0.0
    %2355 = vmatprep.subr.mxu0 0.0
    %2356 = vmatpush1.msra.mxu0 0.0
    %2357 = vmatprep.subr.mxu0 0.0
    %2358 = vmatpush1.msra.mxu0 0.0
    %2359 = vmatprep.subr.mxu0 0.0
    %2360 = vmatpush1.msra.mxu0 0.0
    %2361 = vmatprep.subr.mxu0 0.0
    %2362 = vmatpush1.msra.mxu0 0.0
    %2363 = vmatprep.subr.mxu0 0.0
    %2364 = vmatpush1.msra.mxu0 0.0
    %2365 = vmatprep.subr.mxu0 0.0
    %2366 = vmatpush1.msra.mxu0 0.0
    %2367 = vmatprep.subr.mxu0 0.0
    %2368 = vmatpush1.msra.mxu0 0.0
    %2369 = vmatprep.subr.mxu0 0.0
    %2370 = vmatpush1.msra.mxu0 0.0
    %2371 = vmatprep.subr.mxu0 0.0
    %2372 = vmatpush1.msra.mxu0 0.0
    %2373 = vmatprep.subr.mxu0 0.0
    %2374 = vmatpush1.msra.mxu0 0.0
    %2375 = vmatprep.subr.mxu0 0.0
    %2376 = vmatpush1.msra.mxu0 0.0
    %2377 = vmatprep.subr.mxu0 0.0
    %2378 = vmatpush1.msra.mxu0 0.0
    %2379 = vmatprep.subr.mxu0 0.0
    %2380 = vmatpush1.msra.mxu0 0.0
    %2381 = vmatprep.subr.mxu0 0.0
    %2382 = vmatpush1.msra.mxu0 0.0
    %2383 = vmatprep.subr.mxu0 0.0
    %2384 = vmatpush1.msra.mxu0 0.0
    %2385 = vmatprep.subr.mxu0 0.0
    %2386 = vmatpush1.msra.mxu0 0.0
    %2387 = vmatprep.subr.mxu0 0.0
    %2388 = vmatpush1.msra.mxu0 0.0
    %2389 = vmatprep.subr.mxu0 0.0
    %2390 = vmatpush1.msra.mxu0 0.0
    %2391 = vmatprep.subr.mxu0 0.0
    %2392 = vmatpush1.msra.mxu0 0.0
    %2393 = vmatprep.subr.mxu0 0.0
    %2394 = vmatpush1.msra.mxu0 0.0
    %2395 = vmatprep.subr.mxu0 0.0
    %2396 = vmatpush1.msra.mxu0 0.0
    %2397 = vmatprep.subr.mxu0 0.0
    %2398 = vmatpush1.msra.mxu0 0.0
    %2399 = vmatprep.subr.mxu0 0.0
    %2400 = vmatpush1.msra.mxu0 0.0
    %2401 = vmatprep.subr.mxu0 0.0
    %2402 = vmatpush1.msra.mxu0 0.0
    %2403 = vmatprep.subr.mxu0 0.0
    %2404 = vmatpush1.msra.mxu0 0.0
    %2405 = vmatprep.subr.mxu0 0.0
    %2406 = vmatpush1.msra.mxu0 0.0
    %2407 = vmatprep.mubr.f32.mxu0 0.0
    %2408 = vmatmul.mubr.f32.gmra.mrb[0].mxu0 %v2341
    %v2409 = vpop.f32.mrb[0].mxu0
    %v2410 = vadd.f32 0.0, %v2409
    %v2411 = vpop.f32.mrb[0].mxu0
    %2412 = vdwg.mxu0
    %v2414 = vsel %vm323, %v2410, 0
    %2416 = vmatprep.subr.mxu0 0.0
    %2417 = vmatpush1.msra.mxu0 %v1210
    %2418 = vmatprep.subr.mxu0 0.0
    %2419 = vmatpush1.msra.mxu0 0.0
    %2420 = vmatprep.subr.mxu0 0.0
    %2421 = vmatpush1.msra.mxu0 0.0
    %2422 = vmatprep.subr.mxu0 0.0
    %2423 = vmatpush1.msra.mxu0 0.0
    %2424 = vmatprep.subr.mxu0 0.0
    %2425 = vmatpush1.msra.mxu0 0.0
    %2426 = vmatprep.subr.mxu0 0.0
    %2427 = vmatpush1.msra.mxu0 0.0
    %2428 = vmatprep.subr.mxu0 0.0
    %2429 = vmatpush1.msra.mxu0 0.0
    %2430 = vmatprep.subr.mxu0 0.0
    %2431 = vmatpush1.msra.mxu0 0.0
    %2432 = vmatprep.subr.mxu0 0.0
    %2433 = vmatpush1.msra.mxu0 0.0
    %2434 = vmatprep.subr.mxu0 0.0
    %2435 = vmatpush1.msra.mxu0 0.0
    %2436 = vmatprep.subr.mxu0 0.0
    %2437 = vmatpush1.msra.mxu0 0.0
    %2438 = vmatprep.subr.mxu0 0.0
    %2439 = vmatpush1.msra.mxu0 0.0
    %2440 = vmatprep.subr.mxu0 0.0
    %2441 = vmatpush1.msra.mxu0 0.0
    %2442 = vmatprep.subr.mxu0 0.0
    %2443 = vmatpush1.msra.mxu0 0.0
    %2444 = vmatprep.subr.mxu0 0.0
    %2445 = vmatpush1.msra.mxu0 0.0
    %2446 = vmatprep.subr.mxu0 0.0
    %2447 = vmatpush1.msra.mxu0 0.0
    %2448 = vmatprep.subr.mxu0 0.0
    %2449 = vmatpush1.msra.mxu0 0.0
    %2450 = vmatprep.subr.mxu0 0.0
    %2451 = vmatpush1.msra.mxu0 0.0
    %2452 = vmatprep.subr.mxu0 0.0
    %2453 = vmatpush1.msra.mxu0 0.0
    %2454 = vmatprep.subr.mxu0 0.0
    %2455 = vmatpush1.msra.mxu0 0.0
    %2456 = vmatprep.subr.mxu0 0.0
    %2457 = vmatpush1.msra.mxu0 0.0
    %2458 = vmatprep.subr.mxu0 0.0
    %2459 = vmatpush1.msra.mxu0 0.0
    %2460 = vmatprep.subr.mxu0 0.0
    %2461 = vmatpush1.msra.mxu0 0.0
    %2462 = vmatprep.subr.mxu0 0.0
    %2463 = vmatpush1.msra.mxu0 0.0
    %2464 = vmatprep.subr.mxu0 0.0
    %2465 = vmatpush1.msra.mxu0 0.0
    %2466 = vmatprep.subr.mxu0 0.0
    %2467 = vmatpush1.msra.mxu0 0.0
    %2468 = vmatprep.subr.mxu0 0.0
    %2469 = vmatpush1.msra.mxu0 0.0
    %2470 = vmatprep.subr.mxu0 0.0
    %2471 = vmatpush1.msra.mxu0 0.0
    %2472 = vmatprep.subr.mxu0 0.0
    %2473 = vmatpush1.msra.mxu0 0.0
    %2474 = vmatprep.subr.mxu0 0.0
    %2475 = vmatpush1.msra.mxu0 0.0
    %2476 = vmatprep.subr.mxu0 0.0
    %2477 = vmatpush1.msra.mxu0 0.0
    %2478 = vmatprep.subr.mxu0 0.0
    %2479 = vmatpush1.msra.mxu0 0.0
    %2480 = vmatprep.mubr.f32.mxu0 0.0
    %2481 = vmatmul.mubr.f32.gmra.mrb[0].mxu0 %v2414
    %v2482 = vpop.f32.mrb[0].mxu0
    %v2483 = vadd.f32 0.0, %v2482
    %v2484 = vpop.f32.mrb[0].mxu0
    %2485 = vdwg.mxu0
    %v2486 = vadd.f32 %v2247, %v2483
    %v2487 = vadd.f32 %v2486, %v1289
    %v2488 = vadd.f32 %v1320, %v2487
    %v2489 = vsel %vm70, %v2488, 0.0
    %2490 = vadd.xlane.f32.xlu0 %v2489
    %v2491 = vpop.xlane.xlu0 %2490
    %v2492 = vmul.f32 %v2491, %v1295
    %v2493 = vsub.f32 %v2488, %v2492
    %v2494 = vmul.f32 %v2493, %v2493
    %v2495 = vsel %vm70, %v2494, 0.0
    %2496 = vadd.xlane.f32.xlu0 %v2495
    %v2497 = vpop.xlane.xlu0 %2496
    %v2498 = vmul.f32 %v2497, %v1295
    %v2499 = vadd.f32 %v2498, 1e-05
    %v2500 = vrsqrt.pop %v2499
    %v2501 = vmul.f32 %v2493, %v2500
    %v2502 = vmul.f32 %v2501, %v1309
    %v2503 = vadd.f32 %v2502, %v1314
    %s2504 = scalar_lea.vmem [#allocation8], 8
    %2505 = vst.msk [vmem:[%s2504] sm:$0xff] %vm70, %v2503
    // Predicated region
    $region30: #{tpu_custom_call.1} parent=1 // pred_check
      _
    $region31: #{tpu_custom_call.1} parent=1 // pred_check_branch
      %2507 = sbr.rel (0) target = $region33
    $region32: #{tpu_custom_call.1} parent=1 // pred_region
      %s2509 = ssub.s32 256, 256
      %2510 = vsyncadd [#allocation4], %s2509
      %s2511 = sshll.u32 [#allocation8], 4
      %s2512 = int_to_ptr.vmem [resolvable:$true] %s2511
      %2517 = dma.vmem_to_hbm [thread:$0]  %s2512, 256, %s4, [#allocation4], 128, 128, 8
    $region33: #{tpu_custom_call.1} parent=1 // pred_fallthru
      _
    // Predicated region
    $region34: #{tpu_custom_call.1} parent=1 // pred_check
      _
    $region35: #{tpu_custom_call.1} parent=1 // pred_check_branch
      %2519 = sbr.rel (0) target = $region37
    $region36: #{tpu_custom_call.1} parent=1 // pred_region
      %2520 = dma.done [#allocation4], 256
    $region37: #{tpu_custom_call.1} parent=1 // pred_fallthru
      _
    %2521 = vsyncpa [#allocation3], 1
    %2522 = vsyncpa [#allocation6], 1
    %2523 = vsyncpa [#allocation4], 1

</llo_original>
